<compile_context>
chip_gen: v5e
topology: v5e:2x2
jax: 0.10.0
libtpu: 0.0.40
codegen_flags: <defaults>
</compile_context>

<pallas_src>
import math
import functools

import jax
import jax.numpy as jnp
from jax.experimental import pallas as pl
from jax.experimental.pallas import tpu as pltpu

# ------------------------------- small config --------------------------------
HIDDEN = 32
NUM_HEADS = 4
BATCH = 2
SEQ = 8
LANE = 128          # pad hidden and per-head dim to a full vreg lane width


# --------------------------------- kernel ------------------------------------
def bert_attention_kernel(num_heads, h_real, s_len, lane, has_mask, *refs):
    """Fused MHA + output dense + residual + LayerNorm for ONE batch element."""
    if has_mask:
        (x_ref, mask_ref, wqkv_ref, bqkv_ref, wo_ref,
         bo_ref, g_ref, beta_ref, out_ref) = refs
    else:
        (x_ref, wqkv_ref, bqkv_ref, wo_ref,
         bo_ref, g_ref, beta_ref, out_ref) = refs

    x = x_ref[0]                                    # (S, LANE) bf16; lanes >= h_real are 0

    # One wide projection matmul for all heads' Q|K|V (Q pre-scaled by 1/sqrt(head_dim)).
    qkv = jnp.dot(x, wqkv_ref[...], preferred_element_type=jnp.float32)  # (S, nh*3*LANE) f32
    qkv = (qkv + bqkv_ref[...]).astype(jnp.bfloat16)

    if has_mask:
        mask = mask_ref[0]                          # (mask_q, S) f32, mask_q in {1, S}

    # attention-output accumulator, initialized with the output-dense bias (f32)
    attn = jnp.broadcast_to(bo_ref[...], (s_len, lane))

    for h in range(num_heads):                      # static loop; 128-aligned lane slices only
        base = h * 3 * lane
        q = qkv[:, base            : base + lane]       # (S, LANE) bf16 (already scaled)
        k = qkv[:, base + lane     : base + 2 * lane]
        v = qkv[:, base + 2 * lane : base + 3 * lane]

        scores = jnp.einsum('qd,kd->qk', q, k,
                            preferred_element_type=jnp.float32)          # (S, S) f32
        if has_mask:
            scores = scores + mask                  # broadcast over query rows if mask_q == 1

        # numerically-stable softmax in f32 (attention-probs dropout == identity)
        m_max = jnp.max(scores, axis=-1, keepdims=True)
        e = jnp.exp(scores - m_max)
        denom = jnp.sum(e, axis=-1, keepdims=True)
        p = (e * pl.reciprocal(denom, approx=True)).astype(jnp.bfloat16)

        ctx = jnp.dot(p, v, preferred_element_type=jnp.float32)          # (S, LANE) f32
        # accumulate this head's output-dense contribution directly (no lane concat)
        attn = attn + jnp.dot(ctx.astype(jnp.bfloat16), wo_ref[h],
                              preferred_element_type=jnp.float32)

    # hidden dropout == identity; residual + LayerNorm(eps=1e-12) over real lanes
    y = attn + x.astype(jnp.float32)                # padded lanes are exactly 0
    mu = jnp.sum(y, axis=-1, keepdims=True) / h_real
    lane_idx = jax.lax.broadcasted_iota(jnp.int32, y.shape, 1)
    d = jnp.where(lane_idx < h_real, y - mu, 0.0)
    var = jnp.sum(d * d, axis=-1, keepdims=True) / h_real
    out_ref[0] = d * jax.lax.rsqrt(var + 1e-12) * g_ref[...] + beta_ref[...]


# --------------------- one-time parameter preparation -------------------------
def prepare_bert_attention_params(params, num_heads=NUM_HEADS, lane=LANE):
    """Pad / stack / bf16-cast weights ONCE (hoisted out of the per-call path)."""
    H = params['wq'].shape[0]
    assert H % num_heads == 0
    hd = H // num_heads
    scale = 1.0 / math.sqrt(hd)                    # folded into Q weights & bias

    def head_blocks(w, b, s=1.0):
        # (H_in, H_out) with outputs grouped per head -> (nh, LANE, LANE), bias (nh, 1, LANE)
        w3 = (w * s).reshape(H, num_heads, hd)
        w3 = jnp.pad(w3, ((0, lane - H), (0, 0), (0, lane - hd)))
        w3 = jnp.transpose(w3, (1, 0, 2))
        b3 = jnp.pad((b * s).reshape(num_heads, 1, hd), ((0, 0), (0, 0), (0, lane - hd)))
        return w3, b3

    wq3, bq3 = head_blocks(params['wq'], params['bq'], scale)
    wk3, bk3 = head_blocks(params['wk'], params['bk'])
    wv3, bv3 = head_blocks(params['wv'], params['bv'])

    # per-head [Q|K|V] blocks concatenated along the output-lane axis, heads major:
    # (LANE, nh*3*LANE); kernel slices at 128-lane boundaries.
    wqkv = jnp.concatenate([wq3, wk3, wv3], axis=2)                    # (nh, LANE, 3*LANE)
    wqkv = jnp.transpose(wqkv, (1, 0, 2)).reshape(lane, num_heads * 3 * lane)
    bqkv = jnp.concatenate([bq3, bk3, bv3], axis=2).reshape(num_heads * 3 * lane)[None, :]

    # output dense: (nh, LANE, LANE) per-head input blocks
    wo3 = params['wo'].reshape(num_heads, hd, H)
    wo3 = jnp.pad(wo3, ((0, 0), (0, lane - hd), (0, lane - H)))
    bo2 = jnp.pad(params['bo'].reshape(1, H), ((0, 0), (0, lane - H)))

    g = jnp.pad(params['ln_g'].reshape(1, H), ((0, 0), (0, lane - H)))
    beta = jnp.pad(params['ln_b'].reshape(1, H), ((0, 0), (0, lane - H)))

    return {
        'wqkv': wqkv.astype(jnp.bfloat16),        # bf16 MXU operands
        'bqkv': bqkv.astype(jnp.float32),         # biases / LN stay f32
        'wo': wo3.astype(jnp.bfloat16),
        'bo': bo2.astype(jnp.float32),
        'ln_g': g.astype(jnp.float32),
        'ln_b': beta.astype(jnp.float32),
        'num_heads': num_heads,
        'hidden_size': H,
        'lane': lane,
    }


# --------------------------------- wrapper ------------------------------------
def bert_attention(prepared, hidden_states, attention_mask=None):
    """BertAttention forward.  `attention_mask` is an additive mask broadcastable to
    (B, 1, S, S) (e.g. the usual (B, 1, 1, S) extended mask); per-head masks are not
    supported (BERT never uses them)."""
    B, S, H = hidden_states.shape
    num_heads = prepared['num_heads']
    lane = prepared['lane']
    assert H == prepared['hidden_size']
    nh3 = num_heads * 3 * lane

    x_pad = jnp.pad(hidden_states.astype(jnp.float32),
                    ((0, 0), (0, 0), (0, lane - H))).astype(jnp.bfloat16)   # (B, S, LANE)

    has_mask = attention_mask is not None
    if has_mask:
        m = jnp.asarray(attention_mask, jnp.float32)
        if m.ndim == 4:
            if m.shape[1] != 1:
                raise ValueError("per-head attention masks are not supported")
            m = m[:, 0]                              # (Bm, mask_q, S)
        elif m.ndim == 2:
            m = m[:, None, :]                        # (Bm, 1, S)
        elif m.ndim != 3:
            raise ValueError("unsupported attention_mask rank")
        mask_q = m.shape[1]                          # 1 or S; query broadcast done in-kernel
        m = jnp.broadcast_to(m, (B, mask_q, S))

    def replicated(shape):
        n = len(shape)
        return pl.BlockSpec(shape, lambda b, n=n: (0,) * n)

    in_specs = [pl.BlockSpec((1, S, lane), lambda b: (b, 0, 0))]
    args = [x_pad]
    if has_mask:
        in_specs.append(pl.BlockSpec((1, mask_q, S), lambda b: (b, 0, 0)))
        args.append(m)
    in_specs += [
        replicated((lane, nh3)),                 # wqkv
        replicated((1, nh3)),                    # bqkv
        replicated((num_heads, lane, lane)),     # wo
        replicated((1, lane)),                   # bo
        replicated((1, lane)),                   # gamma
        replicated((1, lane)),                   # beta
    ]
    args += [prepared['wqkv'], prepared['bqkv'], prepared['wo'],
             prepared['bo'], prepared['ln_g'], prepared['ln_b']]

    kern = functools.partial(bert_attention_kernel, num_heads, H, S, lane, has_mask)

    out_pad = pl.pallas_call(
        kern,
        out_shape=jax.ShapeDtypeStruct((B, S, lane), jnp.float32),
        grid=(B,),                                  # batch-parallel: uses both TCs on v7x
        in_specs=in_specs,
        out_specs=pl.BlockSpec((1, S, lane), lambda b: (b, 0, 0)),
        compiler_params=pltpu.CompilerParams(dimension_semantics=("parallel",)),
    )(*args)

    return out_pad[:, :, :H]


# ----------------------------- pure-JAX reference -----------------------------
def bert_attention_ref(params, hidden_states, attention_mask, num_heads=NUM_HEADS):
    B, S, H = hidden_states.shape
    hd = H // num_heads
    q = hidden_states @ params['wq'] + params['bq']
    k = hidden_states @ params['wk'] + params['bk']
    v = hidden_states @ params['wv'] + params['bv']

    def split(t):
        return t.reshape(B, S, num_heads, hd).transpose(0, 2, 1, 3)

    Q, K, V = split(q), split(k), split(v)
    scores = jnp.einsum('bhqd,bhkd->bhqk', Q, K) / math.sqrt(hd)
    if attention_mask is not None:
        scores = scores + attention_mask
    probs = jax.nn.softmax(scores, axis=-1)
    ctx = jnp.einsum('bhqk,bhkd->bhqd', probs, V)
    ctx = ctx.transpose(0, 2, 1, 3).reshape(B, S, H)
    hid = ctx @ params['wo'] + params['bo']
    y = hid + hidden_states
    mu = jnp.mean(y, axis=-1, keepdims=True)
    var = jnp.mean((y - mu) ** 2, axis=-1, keepdims=True)
    return (y - mu) * jax.lax.rsqrt(var + 1e-12) * params['ln_g'] + params['ln_b']


# ----------------------------------- main -------------------------------------
if __name__ == "__main__":
    key = jax.random.PRNGKey(0)
    kx, *kw = jax.random.split(key, 10)
    nrm = lambda k, shape: 0.02 * jax.random.normal(k, shape, dtype=jnp.float32)
    H = HIDDEN

    # Weights stored as (in, out) = PyTorch nn.Linear weight transposed (x @ W + b).
    params = {
        'wq': nrm(kw[0], (H, H)), 'bq': nrm(kw[1], (H,)),
        'wk': nrm(kw[2], (H, H)), 'bk': nrm(kw[3], (H,)),
        'wv': nrm(kw[4], (H, H)), 'bv': nrm(kw[5], (H,)),
        'wo': nrm(kw[6], (H, H)), 'bo': nrm(kw[7], (H,)),
        'ln_g': jnp.ones((H,), jnp.float32),
        'ln_b': jnp.zeros((H,), jnp.float32),
    }

    # One-time (hoisted) parameter preparation: pad / stack / bf16-cast.
    prepared = prepare_bert_attention_params(params, num_heads=NUM_HEADS)

    hidden_states = jax.random.normal(kx, (BATCH, SEQ, H), dtype=jnp.float32)
    # 0/1 key mask -> extended additive mask (B, 1, 1, S); mask out last 2 keys of
    # the second batch element.
    mask01 = jnp.ones((BATCH, SEQ), jnp.float32).at[1, SEQ - 2:].set(0.0)
    attn_bias = ((1.0 - mask01) * -10000.0)[:, None, None, :]

    out = bert_attention(prepared, hidden_states, attn_bias)
    jax.block_until_ready(out)
    assert out.shape == (BATCH, SEQ, H)

    ref = bert_attention_ref(params, hidden_states, attn_bias)
    err = float(jnp.max(jnp.abs(out - ref)))
    assert err < 5e-2, f"max abs err vs reference (masked): {err}"

    # Exercise the no-mask specialization (mask input / DMA elided entirely).
    out_nm = bert_attention(prepared, hidden_states, None)
    jax.block_until_ready(out_nm)
    ref_nm = bert_attention_ref(params, hidden_states, None)
    err_nm = float(jnp.max(jnp.abs(out_nm - ref_nm)))
    assert err_nm < 5e-2, f"max abs err vs reference (no mask): {err_nm}"

    # TODO(synk): nn.Dropout (attention-probs & hidden) is identity here (eval mode);
    # training-mode stochastic dropout is not implemented.
    print("KERNEL_OK")
</pallas_src>

<mosaic_0001>
module attributes {stable_mosaic.version = 11 : i64} {
  func.func @bert_attention_kernel(%arg0: i32, %arg1: memref<1x8x128xbf16, #tpu.memory_space<vmem>>, %arg2: memref<1x1x8xf32, #tpu.memory_space<vmem>>, %arg3: memref<128x1536xbf16, #tpu.memory_space<vmem>>, %arg4: memref<1x1536xf32, #tpu.memory_space<vmem>>, %arg5: memref<4x128x128xbf16, #tpu.memory_space<vmem>>, %arg6: memref<1x128xf32, #tpu.memory_space<vmem>>, %arg7: memref<1x128xf32, #tpu.memory_space<vmem>>, %arg8: memref<1x128xf32, #tpu.memory_space<vmem>>, %arg9: memref<1x8x128xf32, #tpu.memory_space<vmem>>) attributes {dimension_semantics = [#tpu.dimension_semantics<parallel>], iteration_bounds = array<i64: 2>, scalar_prefetch = 0 : i64, scratch_operands = 0 : i64, tpu.core_type = #tpu.core_type<tc>, window_params = [{transform_indices = @transform_0, window_bounds = array<i64: 1, 8, 128>}, {transform_indices = @transform_1, window_bounds = array<i64: 1, 1, 8>}, {pipeline_mode = #tpu.pipeline_mode<synchronous>, transform_indices = @transform_2, window_bounds = array<i64: 128, 1536>}, {pipeline_mode = #tpu.pipeline_mode<synchronous>, transform_indices = @transform_3, window_bounds = array<i64: 1, 1536>}, {pipeline_mode = #tpu.pipeline_mode<synchronous>, transform_indices = @transform_4, window_bounds = array<i64: 4, 128, 128>}, {pipeline_mode = #tpu.pipeline_mode<synchronous>, transform_indices = @transform_5, window_bounds = array<i64: 1, 128>}, {pipeline_mode = #tpu.pipeline_mode<synchronous>, transform_indices = @transform_6, window_bounds = array<i64: 1, 128>}, {pipeline_mode = #tpu.pipeline_mode<synchronous>, transform_indices = @transform_7, window_bounds = array<i64: 1, 128>}, {transform_indices = @transform_8, window_bounds = array<i64: 1, 8, 128>}]} {
    %c0 = arith.constant 0 : index
    %c0_0 = arith.constant 0 : index
    %c0_1 = arith.constant 0 : index
    %0 = vector.load %arg1[%c0, %c0_0, %c0_1] : memref<1x8x128xbf16, #tpu.memory_space<vmem>>, vector<1x8x128xbf16>
    %1 = vector.shape_cast %0 : vector<1x8x128xbf16> to vector<8x128xbf16>
    %c0_2 = arith.constant 0 : index
    %c0_3 = arith.constant 0 : index
    %2 = vector.load %arg3[%c0_2, %c0_3] : memref<128x1536xbf16, #tpu.memory_space<vmem>>, vector<128x1536xbf16>
    %cst = arith.constant dense<0.000000e+00> : vector<8x1536xf32>
    %3 = tpu.matmul %1, %2, %cst {dimension_numbers = #tpu.dot_dimension_numbers<[1], [0], [0], [1], [0, 0, 1, 1], [], []>} : vector<8x128xbf16>, vector<128x1536xbf16>, vector<8x1536xf32> -> vector<8x1536xf32>
    %c0_4 = arith.constant 0 : index
    %c0_5 = arith.constant 0 : index
    %4 = vector.load %arg4[%c0_4, %c0_5] : memref<1x1536xf32, #tpu.memory_space<vmem>>, vector<1x1536xf32>
    %5 = vector.broadcast %4 : vector<1x1536xf32> to vector<8x1536xf32>
    %6 = arith.addf %3, %5 : vector<8x1536xf32>
    %7 = arith.truncf %6 : vector<8x1536xf32> to vector<8x1536xbf16>
    %c0_6 = arith.constant 0 : index
    %c0_7 = arith.constant 0 : index
    %c0_8 = arith.constant 0 : index
    %8 = vector.load %arg2[%c0_6, %c0_7, %c0_8] : memref<1x1x8xf32, #tpu.memory_space<vmem>>, vector<1x1x8xf32>
    %9 = vector.shape_cast %8 : vector<1x1x8xf32> to vector<1x8xf32>
    %c0_9 = arith.constant 0 : index
    %c0_10 = arith.constant 0 : index
    %10 = vector.load %arg6[%c0_9, %c0_10] : memref<1x128xf32, #tpu.memory_space<vmem>>, vector<1x128xf32>
    %11 = vector.shape_cast %10 : vector<1x128xf32> to vector<1x128xf32>
    %12 = vector.broadcast %11 : vector<1x128xf32> to vector<8x128xf32>
    %13 = vector.extract_strided_slice %7 {offsets = [0, 0], sizes = [8, 128], strides = [1, 1]} : vector<8x1536xbf16> to vector<8x128xbf16>
    %14 = vector.extract_strided_slice %7 {offsets = [0, 128], sizes = [8, 128], strides = [1, 1]} : vector<8x1536xbf16> to vector<8x128xbf16>
    %15 = vector.extract_strided_slice %7 {offsets = [0, 256], sizes = [8, 128], strides = [1, 1]} : vector<8x1536xbf16> to vector<8x128xbf16>
    "tpu.trace_start"() <{level = 10 : i32, message = "qd,kd->qk"}> : () -> ()
    %cst_11 = arith.constant dense<0.000000e+00> : vector<8x8xf32>
    %16 = tpu.matmul %13, %14, %cst_11 {dimension_numbers = #tpu.dot_dimension_numbers<[1], [1], [0], [0], [0, 0, 1, 0], [], []>} : vector<8x128xbf16>, vector<8x128xbf16>, vector<8x8xf32> -> vector<8x8xf32>
    "tpu.trace_stop"() : () -> ()
    %17 = vector.broadcast %9 : vector<1x8xf32> to vector<8x8xf32>
    %18 = arith.addf %16, %17 : vector<8x8xf32>
    %cst_12 = arith.constant dense<0xFF800000> : vector<8xf32>
    %19 = vector.multi_reduction <maximumf>, %18, %cst_12 [1] : vector<8x8xf32> to vector<8xf32>
    %20 = vector.shape_cast %19 : vector<8xf32> to vector<8x1xf32>
    %21 = vector.broadcast %20 : vector<8x1xf32> to vector<8x8xf32>
    %22 = arith.subf %18, %21 : vector<8x8xf32>
    %23 = math.exp %22 : vector<8x8xf32>
    %cst_13 = arith.constant dense<0.000000e+00> : vector<8xf32>
    %24 = vector.multi_reduction <add>, %23, %cst_13 [1] : vector<8x8xf32> to vector<8xf32>
    %25 = vector.shape_cast %24 : vector<8xf32> to vector<8x1xf32>
    %26 = tpu.reciprocal %25 {approx = true} : vector<8x1xf32> -> vector<8x1xf32>
    %27 = vector.broadcast %26 : vector<8x1xf32> to vector<8x8xf32>
    %28 = arith.mulf %23, %27 : vector<8x8xf32>
    %29 = arith.truncf %28 : vector<8x8xf32> to vector<8x8xbf16>
    %cst_14 = arith.constant dense<0.000000e+00> : vector<8x128xf32>
    %30 = tpu.matmul %29, %15, %cst_14 {dimension_numbers = #tpu.dot_dimension_numbers<[1], [0], [0], [1], [0, 0, 1, 1], [], []>} : vector<8x8xbf16>, vector<8x128xbf16>, vector<8x128xf32> -> vector<8x128xf32>
    %31 = arith.truncf %30 : vector<8x128xf32> to vector<8x128xbf16>
    %c0_15 = arith.constant 0 : index
    %c0_16 = arith.constant 0 : index
    %c0_17 = arith.constant 0 : index
    %32 = vector.load %arg5[%c0_15, %c0_16, %c0_17] : memref<4x128x128xbf16, #tpu.memory_space<vmem>>, vector<1x128x128xbf16>
    %33 = vector.shape_cast %32 : vector<1x128x128xbf16> to vector<128x128xbf16>
    %cst_18 = arith.constant dense<0.000000e+00> : vector<8x128xf32>
    %34 = tpu.matmul %31, %33, %cst_18 {dimension_numbers = #tpu.dot_dimension_numbers<[1], [0], [0], [1], [0, 0, 1, 1], [], []>} : vector<8x128xbf16>, vector<128x128xbf16>, vector<8x128xf32> -> vector<8x128xf32>
    %35 = arith.addf %12, %34 : vector<8x128xf32>
    %36 = vector.extract_strided_slice %7 {offsets = [0, 384], sizes = [8, 128], strides = [1, 1]} : vector<8x1536xbf16> to vector<8x128xbf16>
    %37 = vector.extract_strided_slice %7 {offsets = [0, 512], sizes = [8, 128], strides = [1, 1]} : vector<8x1536xbf16> to vector<8x128xbf16>
    %38 = vector.extract_strided_slice %7 {offsets = [0, 640], sizes = [8, 128], strides = [1, 1]} : vector<8x1536xbf16> to vector<8x128xbf16>
    "tpu.trace_start"() <{level = 10 : i32, message = "qd,kd->qk"}> : () -> ()
    %cst_19 = arith.constant dense<0.000000e+00> : vector<8x8xf32>
    %39 = tpu.matmul %36, %37, %cst_19 {dimension_numbers = #tpu.dot_dimension_numbers<[1], [1], [0], [0], [0, 0, 1, 0], [], []>} : vector<8x128xbf16>, vector<8x128xbf16>, vector<8x8xf32> -> vector<8x8xf32>
    "tpu.trace_stop"() : () -> ()
    %40 = vector.broadcast %9 : vector<1x8xf32> to vector<8x8xf32>
    %41 = arith.addf %39, %40 : vector<8x8xf32>
    %cst_20 = arith.constant dense<0xFF800000> : vector<8xf32>
    %42 = vector.multi_reduction <maximumf>, %41, %cst_20 [1] : vector<8x8xf32> to vector<8xf32>
    %43 = vector.shape_cast %42 : vector<8xf32> to vector<8x1xf32>
    %44 = vector.broadcast %43 : vector<8x1xf32> to vector<8x8xf32>
    %45 = arith.subf %41, %44 : vector<8x8xf32>
    %46 = math.exp %45 : vector<8x8xf32>
    %cst_21 = arith.constant dense<0.000000e+00> : vector<8xf32>
    %47 = vector.multi_reduction <add>, %46, %cst_21 [1] : vector<8x8xf32> to vector<8xf32>
    %48 = vector.shape_cast %47 : vector<8xf32> to vector<8x1xf32>
    %49 = tpu.reciprocal %48 {approx = true} : vector<8x1xf32> -> vector<8x1xf32>
    %50 = vector.broadcast %49 : vector<8x1xf32> to vector<8x8xf32>
    %51 = arith.mulf %46, %50 : vector<8x8xf32>
    %52 = arith.truncf %51 : vector<8x8xf32> to vector<8x8xbf16>
    %cst_22 = arith.constant dense<0.000000e+00> : vector<8x128xf32>
    %53 = tpu.matmul %52, %38, %cst_22 {dimension_numbers = #tpu.dot_dimension_numbers<[1], [0], [0], [1], [0, 0, 1, 1], [], []>} : vector<8x8xbf16>, vector<8x128xbf16>, vector<8x128xf32> -> vector<8x128xf32>
    %54 = arith.truncf %53 : vector<8x128xf32> to vector<8x128xbf16>
    %c1 = arith.constant 1 : index
    %c0_23 = arith.constant 0 : index
    %c0_24 = arith.constant 0 : index
    %55 = vector.load %arg5[%c1, %c0_23, %c0_24] : memref<4x128x128xbf16, #tpu.memory_space<vmem>>, vector<1x128x128xbf16>
    %56 = vector.shape_cast %55 : vector<1x128x128xbf16> to vector<128x128xbf16>
    %cst_25 = arith.constant dense<0.000000e+00> : vector<8x128xf32>
    %57 = tpu.matmul %54, %56, %cst_25 {dimension_numbers = #tpu.dot_dimension_numbers<[1], [0], [0], [1], [0, 0, 1, 1], [], []>} : vector<8x128xbf16>, vector<128x128xbf16>, vector<8x128xf32> -> vector<8x128xf32>
    %58 = arith.addf %35, %57 : vector<8x128xf32>
    %59 = vector.extract_strided_slice %7 {offsets = [0, 768], sizes = [8, 128], strides = [1, 1]} : vector<8x1536xbf16> to vector<8x128xbf16>
    %60 = vector.extract_strided_slice %7 {offsets = [0, 896], sizes = [8, 128], strides = [1, 1]} : vector<8x1536xbf16> to vector<8x128xbf16>
    %61 = vector.extract_strided_slice %7 {offsets = [0, 1024], sizes = [8, 128], strides = [1, 1]} : vector<8x1536xbf16> to vector<8x128xbf16>
    "tpu.trace_start"() <{level = 10 : i32, message = "qd,kd->qk"}> : () -> ()
    %cst_26 = arith.constant dense<0.000000e+00> : vector<8x8xf32>
    %62 = tpu.matmul %59, %60, %cst_26 {dimension_numbers = #tpu.dot_dimension_numbers<[1], [1], [0], [0], [0, 0, 1, 0], [], []>} : vector<8x128xbf16>, vector<8x128xbf16>, vector<8x8xf32> -> vector<8x8xf32>
    "tpu.trace_stop"() : () -> ()
    %63 = vector.broadcast %9 : vector<1x8xf32> to vector<8x8xf32>
    %64 = arith.addf %62, %63 : vector<8x8xf32>
    %cst_27 = arith.constant dense<0xFF800000> : vector<8xf32>
    %65 = vector.multi_reduction <maximumf>, %64, %cst_27 [1] : vector<8x8xf32> to vector<8xf32>
    %66 = vector.shape_cast %65 : vector<8xf32> to vector<8x1xf32>
    %67 = vector.broadcast %66 : vector<8x1xf32> to vector<8x8xf32>
    %68 = arith.subf %64, %67 : vector<8x8xf32>
    %69 = math.exp %68 : vector<8x8xf32>
    %cst_28 = arith.constant dense<0.000000e+00> : vector<8xf32>
    %70 = vector.multi_reduction <add>, %69, %cst_28 [1] : vector<8x8xf32> to vector<8xf32>
    %71 = vector.shape_cast %70 : vector<8xf32> to vector<8x1xf32>
    %72 = tpu.reciprocal %71 {approx = true} : vector<8x1xf32> -> vector<8x1xf32>
    %73 = vector.broadcast %72 : vector<8x1xf32> to vector<8x8xf32>
    %74 = arith.mulf %69, %73 : vector<8x8xf32>
    %75 = arith.truncf %74 : vector<8x8xf32> to vector<8x8xbf16>
    %cst_29 = arith.constant dense<0.000000e+00> : vector<8x128xf32>
    %76 = tpu.matmul %75, %61, %cst_29 {dimension_numbers = #tpu.dot_dimension_numbers<[1], [0], [0], [1], [0, 0, 1, 1], [], []>} : vector<8x8xbf16>, vector<8x128xbf16>, vector<8x128xf32> -> vector<8x128xf32>
    %77 = arith.truncf %76 : vector<8x128xf32> to vector<8x128xbf16>
    %c2 = arith.constant 2 : index
    %c0_30 = arith.constant 0 : index
    %c0_31 = arith.constant 0 : index
    %78 = vector.load %arg5[%c2, %c0_30, %c0_31] : memref<4x128x128xbf16, #tpu.memory_space<vmem>>, vector<1x128x128xbf16>
    %79 = vector.shape_cast %78 : vector<1x128x128xbf16> to vector<128x128xbf16>
    %cst_32 = arith.constant dense<0.000000e+00> : vector<8x128xf32>
    %80 = tpu.matmul %77, %79, %cst_32 {dimension_numbers = #tpu.dot_dimension_numbers<[1], [0], [0], [1], [0, 0, 1, 1], [], []>} : vector<8x128xbf16>, vector<128x128xbf16>, vector<8x128xf32> -> vector<8x128xf32>
    %81 = arith.addf %58, %80 : vector<8x128xf32>
    %82 = vector.extract_strided_slice %7 {offsets = [0, 1152], sizes = [8, 128], strides = [1, 1]} : vector<8x1536xbf16> to vector<8x128xbf16>
    %83 = vector.extract_strided_slice %7 {offsets = [0, 1280], sizes = [8, 128], strides = [1, 1]} : vector<8x1536xbf16> to vector<8x128xbf16>
    %84 = vector.extract_strided_slice %7 {offsets = [0, 1408], sizes = [8, 128], strides = [1, 1]} : vector<8x1536xbf16> to vector<8x128xbf16>
    "tpu.trace_start"() <{level = 10 : i32, message = "qd,kd->qk"}> : () -> ()
    %cst_33 = arith.constant dense<0.000000e+00> : vector<8x8xf32>
    %85 = tpu.matmul %82, %83, %cst_33 {dimension_numbers = #tpu.dot_dimension_numbers<[1], [1], [0], [0], [0, 0, 1, 0], [], []>} : vector<8x128xbf16>, vector<8x128xbf16>, vector<8x8xf32> -> vector<8x8xf32>
    "tpu.trace_stop"() : () -> ()
    %86 = vector.broadcast %9 : vector<1x8xf32> to vector<8x8xf32>
    %87 = arith.addf %85, %86 : vector<8x8xf32>
    %cst_34 = arith.constant dense<0xFF800000> : vector<8xf32>
    %88 = vector.multi_reduction <maximumf>, %87, %cst_34 [1] : vector<8x8xf32> to vector<8xf32>
    %89 = vector.shape_cast %88 : vector<8xf32> to vector<8x1xf32>
    %90 = vector.broadcast %89 : vector<8x1xf32> to vector<8x8xf32>
    %91 = arith.subf %87, %90 : vector<8x8xf32>
    %92 = math.exp %91 : vector<8x8xf32>
    %cst_35 = arith.constant dense<0.000000e+00> : vector<8xf32>
    %93 = vector.multi_reduction <add>, %92, %cst_35 [1] : vector<8x8xf32> to vector<8xf32>
    %94 = vector.shape_cast %93 : vector<8xf32> to vector<8x1xf32>
    %95 = tpu.reciprocal %94 {approx = true} : vector<8x1xf32> -> vector<8x1xf32>
    %96 = vector.broadcast %95 : vector<8x1xf32> to vector<8x8xf32>
    %97 = arith.mulf %92, %96 : vector<8x8xf32>
    %98 = arith.truncf %97 : vector<8x8xf32> to vector<8x8xbf16>
    %cst_36 = arith.constant dense<0.000000e+00> : vector<8x128xf32>
    %99 = tpu.matmul %98, %84, %cst_36 {dimension_numbers = #tpu.dot_dimension_numbers<[1], [0], [0], [1], [0, 0, 1, 1], [], []>} : vector<8x8xbf16>, vector<8x128xbf16>, vector<8x128xf32> -> vector<8x128xf32>
    %100 = arith.truncf %99 : vector<8x128xf32> to vector<8x128xbf16>
    %c3 = arith.constant 3 : index
    %c0_37 = arith.constant 0 : index
    %c0_38 = arith.constant 0 : index
    %101 = vector.load %arg5[%c3, %c0_37, %c0_38] : memref<4x128x128xbf16, #tpu.memory_space<vmem>>, vector<1x128x128xbf16>
    %102 = vector.shape_cast %101 : vector<1x128x128xbf16> to vector<128x128xbf16>
    %cst_39 = arith.constant dense<0.000000e+00> : vector<8x128xf32>
    %103 = tpu.matmul %100, %102, %cst_39 {dimension_numbers = #tpu.dot_dimension_numbers<[1], [0], [0], [1], [0, 0, 1, 1], [], []>} : vector<8x128xbf16>, vector<128x128xbf16>, vector<8x128xf32> -> vector<8x128xf32>
    %104 = arith.addf %81, %103 : vector<8x128xf32>
    %105 = arith.extf %1 : vector<8x128xbf16> to vector<8x128xf32>
    %106 = arith.addf %104, %105 : vector<8x128xf32>
    %cst_40 = arith.constant dense<0.000000e+00> : vector<8xf32>
    %107 = vector.multi_reduction <add>, %106, %cst_40 [1] : vector<8x128xf32> to vector<8xf32>
    %108 = vector.shape_cast %107 : vector<8xf32> to vector<8x1xf32>
    %cst_41 = arith.constant 3.200000e+01 : f32
    %109 = vector.broadcast %cst_41 : f32 to vector<8x1xf32>
    %110 = arith.divf %108, %109 : vector<8x1xf32>
    %111 = tpu.iota {dimensions = array<i32: 1>} : vector<8x128xi32>
    %c32_i32 = arith.constant 32 : i32
    %112 = vector.broadcast %c32_i32 : i32 to vector<8x128xi32>
    %113 = arith.cmpi slt, %111, %112 : vector<8x128xi32>
    %114 = vector.broadcast %110 : vector<8x1xf32> to vector<8x128xf32>
    %115 = arith.subf %106, %114 : vector<8x128xf32>
    %cst_42 = arith.constant 0.000000e+00 : f32
    %116 = vector.broadcast %cst_42 : f32 to vector<8x128xf32>
    %117 = arith.select %113, %115, %116 : vector<8x128xi1>, vector<8x128xf32>
    %118 = arith.mulf %117, %117 : vector<8x128xf32>
    %cst_43 = arith.constant dense<0.000000e+00> : vector<8xf32>
    %119 = vector.multi_reduction <add>, %118, %cst_43 [1] : vector<8x128xf32> to vector<8xf32>
    %120 = vector.shape_cast %119 : vector<8xf32> to vector<8x1xf32>
    %cst_44 = arith.constant 3.200000e+01 : f32
    %121 = vector.broadcast %cst_44 : f32 to vector<8x1xf32>
    %122 = arith.divf %120, %121 : vector<8x1xf32>
    %cst_45 = arith.constant 9.99999996E-13 : f32
    %123 = vector.broadcast %cst_45 : f32 to vector<8x1xf32>
    %124 = arith.addf %122, %123 : vector<8x1xf32>
    %125 = math.rsqrt %124 : vector<8x1xf32>
    %126 = vector.broadcast %125 : vector<8x1xf32> to vector<8x128xf32>
    %127 = arith.mulf %117, %126 : vector<8x128xf32>
    %c0_46 = arith.constant 0 : index
    %c0_47 = arith.constant 0 : index
    %128 = vector.load %arg7[%c0_46, %c0_47] : memref<1x128xf32, #tpu.memory_space<vmem>>, vector<1x128xf32>
    %129 = vector.broadcast %128 : vector<1x128xf32> to vector<8x128xf32>
    %130 = arith.mulf %127, %129 : vector<8x128xf32>
    %c0_48 = arith.constant 0 : index
    %c0_49 = arith.constant 0 : index
    %131 = vector.load %arg8[%c0_48, %c0_49] : memref<1x128xf32, #tpu.memory_space<vmem>>, vector<1x128xf32>
    %132 = vector.broadcast %131 : vector<1x128xf32> to vector<8x128xf32>
    %133 = arith.addf %130, %132 : vector<8x128xf32>
    %c0_50 = arith.constant 0 : index
    %c0_51 = arith.constant 0 : index
    %c0_52 = arith.constant 0 : index
    %134 = vector.load %arg9[%c0_50, %c0_51, %c0_52] : memref<1x8x128xf32, #tpu.memory_space<vmem>>, vector<1x8x128xf32>
    %135 = vector.shape_cast %134 : vector<1x8x128xf32> to vector<8x128xf32>
    %136 = vector.shape_cast %133 : vector<8x128xf32> to vector<1x8x128xf32>
    tpu.vector_store %arg9[%c0_50, %c0_51, %c0_52], %136 {strides = array<i32>} : memref<1x8x128xf32, #tpu.memory_space<vmem>>, vector<1x8x128xf32>,
    return
  }
  func.func @transform_0(%arg0: i32) -> (i32, i32, i32) {
    %c0_i32 = arith.constant 0 : i32
    %c0_i32_0 = arith.constant 0 : i32
    %c0_i32_1 = arith.constant 0 : i32
    return %arg0, %c0_i32, %c0_i32_0 : i32, i32, i32
  }
  func.func @transform_1(%arg0: i32) -> (i32, i32, i32) {
    %c0_i32 = arith.constant 0 : i32
    %c0_i32_0 = arith.constant 0 : i32
    %c0_i32_1 = arith.constant 0 : i32
    return %arg0, %c0_i32, %c0_i32_0 : i32, i32, i32
  }
  func.func @transform_2(%arg0: i32) -> (i32, i32) {
    %c0_i32 = arith.constant 0 : i32
    %c0_i32_0 = arith.constant 0 : i32
    %c0_i32_1 = arith.constant 0 : i32
    return %c0_i32, %c0_i32_0 : i32, i32
  }
  func.func @transform_3(%arg0: i32) -> (i32, i32) {
    %c0_i32 = arith.constant 0 : i32
    %c0_i32_0 = arith.constant 0 : i32
    %c0_i32_1 = arith.constant 0 : i32
    return %c0_i32, %c0_i32_0 : i32, i32
  }
  func.func @transform_4(%arg0: i32) -> (i32, i32, i32) {
    %c0_i32 = arith.constant 0 : i32
    %c0_i32_0 = arith.constant 0 : i32
    %c0_i32_1 = arith.constant 0 : i32
    %c0_i32_2 = arith.constant 0 : i32
    return %c0_i32, %c0_i32_0, %c0_i32_1 : i32, i32, i32
  }
  func.func @transform_5(%arg0: i32) -> (i32, i32) {
    %c0_i32 = arith.constant 0 : i32
    %c0_i32_0 = arith.constant 0 : i32
    %c0_i32_1 = arith.constant 0 : i32
    return %c0_i32, %c0_i32_0 : i32, i32
  }
  func.func @transform_6(%arg0: i32) -> (i32, i32) {
    %c0_i32 = arith.constant 0 : i32
    %c0_i32_0 = arith.constant 0 : i32
    %c0_i32_1 = arith.constant 0 : i32
    return %c0_i32, %c0_i32_0 : i32, i32
  }
  func.func @transform_7(%arg0: i32) -> (i32, i32) {
    %c0_i32 = arith.constant 0 : i32
    %c0_i32_0 = arith.constant 0 : i32
    %c0_i32_1 = arith.constant 0 : i32
    return %c0_i32, %c0_i32_0 : i32, i32
  }
  func.func @transform_8(%arg0: i32) -> (i32, i32, i32) {
    %c0_i32 = arith.constant 0 : i32
    %c0_i32_0 = arith.constant 0 : i32
    %c0_i32_1 = arith.constant 0 : i32
    return %arg0, %c0_i32, %c0_i32_0 : i32, i32, i32
  }
}

</mosaic_0001>

<llo_original>
// kernel: tpu_custom_call.1
$region0: #{tpu_custom_call.1}
  #allocation0 [shape = 'u32[]', space=smem, size = 0x4, offset = 0x4, fixed_abs, tag = 'smem constant byte address 0x4 - core index']
  #allocation1 [shape = 'u32[72,128]{1,0:T(1,128)}', space=vmem, size = 0x9000, scoped, tag = 'internal scratch']
  %s0 = inlined_call_operand.hbm [shape: bf16[2,8,128], index: 0, kind: input, shape index: {}]
  %s1 = inlined_call_operand.hbm [shape: f32[2,1,8], index: 1, kind: input, shape index: {}]
  %s2 = inlined_call_operand.hbm [shape: bf16[128,1536], index: 2, kind: input, shape index: {}]
  %s3 = inlined_call_operand.hbm [shape: f32[1,1536], index: 3, kind: input, shape index: {}]
  %s4 = inlined_call_operand.hbm [shape: bf16[4,128,128], index: 4, kind: input, shape index: {}]
  %s5 = inlined_call_operand.vmem [shape: f32[1,128], index: 5, kind: input, shape index: {}]
  %s6 = inlined_call_operand.vmem [shape: f32[1,128], index: 6, kind: input, shape index: {}]
  %s7 = inlined_call_operand.vmem [shape: f32[1,128], index: 7, kind: input, shape index: {}]
  %s8 = inlined_call_operand.hbm [shape: f32[2,8,128], index: 8, kind: output, shape index: {}]
  %s9 = sld [smem:[#allocation0]]
  $region85: #{tpu_custom_call.1} parent=0
    _
  %s11 = ssub.s32 1, %s9
  %s12 = scalar_select 0, %s11, %s9
  $region1: #{tpu_custom_call.1} parent=0
    #allocation2 [shape = 'u8[4096]{0}', space=vmem, size = 0x1000, scoped, tag = 'input window, operand 0']
    #allocation3 [shape = 's32[2]{0}', space=sflag, size = 0x8, scoped, tag = 'scoped memory for tpu_custom_call.1']
    #allocation4 [shape = 's32[2]{0}', space=sflag, size = 0x8, scoped, tag = 'scoped memory for tpu_custom_call.1']
    #allocation5 [shape = 'u8[1024]{0}', space=vmem, size = 0x400, scoped, tag = 'input window, operand 1']
    #allocation6 [shape = 's32[2]{0}', space=sflag, size = 0x8, scoped, tag = 'scoped memory for tpu_custom_call.1']
    #allocation7 [shape = 'u8[393216]{0}', space=vmem, size = 0x60000, scoped, tag = 'input window, operand 2, single buffered']
    #allocation8 [shape = 'u8[6144]{0}', space=vmem, size = 0x1800, scoped, tag = 'input window, operand 3, single buffered']
    #allocation9 [shape = 's32[1]{0}', space=sflag, size = 0x4, scoped, tag = 'scoped memory for tpu_custom_call.1']
    #allocation10 [shape = 'u8[131072]{0}', space=vmem, size = 0x20000, scoped, tag = 'input window, operand 4, single buffered']
    #allocation11 [shape = 'u8[8192]{0}', space=vmem, size = 0x2000, scoped, tag = 'output window, operand 0']
    %13 = vsyncpa [#allocation3], 0
    %s14 = scalar_lea.sflag [#allocation3], 1
    %15 = vsyncpa %s14, 0
    %16 = vsyncpa [#allocation6], 0
    %s17 = scalar_lea.sflag [#allocation6], 1
    %18 = vsyncpa %s17, 0
    %19 = vsyncpa [#allocation9], 0
    %20 = vsyncpa [#allocation4], 0
    %s21 = scalar_lea.sflag [#allocation4], 1
    %22 = vsyncpa %s21, 0
    loop: start=0, step=1, limit=4
    $region2: #{tpu_custom_call.1} parent=1 // loop_pre_header
      _
    $region3: #{tpu_custom_call.1} parent=1 // loop_header
      %s24 = sphi 0, %s28
      %p25 = scmp.ge.s32.totalorder %s24, 4
      %s34 = sphi 0, %s36
      %s37 = sphi 0, %s34
      %s38 = sphi 0, %s37
      %s54 = sphi 0, %s38
      %s60 = sphi 0, %s62
      %s63 = sphi 0, %s60
      %s64 = sphi 0, %s63
      %s80 = sphi 0, %s64
      %s84 = sphi 0, %s84
      %s86 = sphi 0, %s84
      %s87 = sphi 0, %s86
      %s101 = sphi 0, %s87
      %s105 = sphi 0, %s105
      %s107 = sphi 0, %s105
      %s108 = sphi 0, %s107
      %s122 = sphi 0, %s108
      %s126 = sphi 0, %s126
      %s128 = sphi 0, %s126
      %s129 = sphi 0, %s128
      %s143 = sphi 0, %s129
      %s147 = sphi 0, %s147
      %s149 = sphi 0, %s147
      %s150 = sphi 0, %s149
      %s164 = sphi 0, %s150
      %s168 = sphi 0, %s168
      %s170 = sphi 0, %s168
      %s171 = sphi 0, %s170
      %s185 = sphi 0, %s171
      %s189 = sphi 0, %s189
      %s191 = sphi 0, %s189
      %s192 = sphi 0, %s191
      %s206 = sphi 0, %s192
      %s212 = sphi 0, %s214
      %s215 = sphi 0, %s212
      %s216 = sphi 0, %s215
      %s232 = sphi 0, %s216
    $region4: #{tpu_custom_call.1} parent=1 // loop_header_branch
      %27 = sbr.rel (%p25) target = $region8
    $region5: #{tpu_custom_call.1} parent=1 // loop_body
      %s29 = ssub.s32 %s24, 1
      %s30 = ssub.s32 %s24, 2
      %s31 = sadd.s32 %s24, 1
      %s32 = ssub.s32 %s24, %s31
      %p33 = scmp.eq.s32.totalorder %s32, 0
      %s35 = sadd.s32 %s34, 1
      %s36 = scalar_select %p33, %s34, %s35
      %p39 = pneg %p33
      %p40 = scmp.eq.s32.totalorder %s24, 1
      %p41 = por %p39, %p40
      %p42 = scmp.ne.s32.totalorder %s34, %s37
      %p43 = scmp.eq.s32.totalorder %s24, 0
      %p44 = por %p42, %p43
      %p45 = scmp.ne.s32.totalorder %s34, %s37
      %p46 = scmp.eq.s32.totalorder %s29, 1
      %p47 = por %p45, %p46
      %p48 = scmp.ne.s32.totalorder %s37, %s38
      %p49 = scmp.eq.s32.totalorder %s29, 0
      %p50 = por %p48, %p49
      %p51 = scmp.ne.s32.totalorder %s37, %s38
      %p52 = scmp.eq.s32.totalorder %s30, 1
      %p53 = por %p51, %p52
      %p55 = scmp.ne.s32.totalorder %s38, %s54
      %p56 = scmp.eq.s32.totalorder %s30, 0
      %p57 = por %p55, %p56
      %s58 = ssub.s32 %s24, %s31
      %p59 = scmp.eq.s32.totalorder %s58, 0
      %s61 = sadd.s32 %s60, 1
      %s62 = scalar_select %p59, %s60, %s61
      %p65 = pneg %p59
      %p66 = scmp.eq.s32.totalorder %s24, 1
      %p67 = por %p65, %p66
      %p68 = scmp.ne.s32.totalorder %s60, %s63
      %p69 = scmp.eq.s32.totalorder %s24, 0
      %p70 = por %p68, %p69
      %p71 = scmp.ne.s32.totalorder %s60, %s63
      %p72 = scmp.eq.s32.totalorder %s29, 1
      %p73 = por %p71, %p72
      %p74 = scmp.ne.s32.totalorder %s63, %s64
      %p75 = scmp.eq.s32.totalorder %s29, 0
      %p76 = por %p74, %p75
      %p77 = scmp.ne.s32.totalorder %s63, %s64
      %p78 = scmp.eq.s32.totalorder %s30, 1
      %p79 = por %p77, %p78
      %p81 = scmp.ne.s32.totalorder %s64, %s80
      %p82 = scmp.eq.s32.totalorder %s30, 0
      %p83 = por %p81, %p82
      %s85 = sadd.s32 %s84, 1
      %p88 = scmp.eq.s32.totalorder %s24, 1
      %p89 = scmp.ne.s32.totalorder %s84, %s86
      %p90 = scmp.eq.s32.totalorder %s24, 0
      %p91 = por %p89, %p90
      %p92 = scmp.ne.s32.totalorder %s84, %s86
      %p93 = scmp.eq.s32.totalorder %s29, 1
      %p94 = por %p92, %p93
      %p95 = scmp.ne.s32.totalorder %s86, %s87
      %p96 = scmp.eq.s32.totalorder %s29, 0
      %p97 = por %p95, %p96
      %p98 = scmp.ne.s32.totalorder %s86, %s87
      %p99 = scmp.eq.s32.totalorder %s30, 1
      %p100 = por %p98, %p99
      %p102 = scmp.ne.s32.totalorder %s87, %s101
      %p103 = scmp.eq.s32.totalorder %s30, 0
      %p104 = por %p102, %p103
      %s106 = sadd.s32 %s105, 1
      %p109 = scmp.eq.s32.totalorder %s24, 1
      %p110 = scmp.ne.s32.totalorder %s105, %s107
      %p111 = scmp.eq.s32.totalorder %s24, 0
      %p112 = por %p110, %p111
      %p113 = scmp.ne.s32.totalorder %s105, %s107
      %p114 = scmp.eq.s32.totalorder %s29, 1
      %p115 = por %p113, %p114
      %p116 = scmp.ne.s32.totalorder %s107, %s108
      %p117 = scmp.eq.s32.totalorder %s29, 0
      %p118 = por %p116, %p117
      %p119 = scmp.ne.s32.totalorder %s107, %s108
      %p120 = scmp.eq.s32.totalorder %s30, 1
      %p121 = por %p119, %p120
      %p123 = scmp.ne.s32.totalorder %s108, %s122
      %p124 = scmp.eq.s32.totalorder %s30, 0
      %p125 = por %p123, %p124
      %s127 = sadd.s32 %s126, 1
      %p130 = scmp.eq.s32.totalorder %s24, 1
      %p131 = scmp.ne.s32.totalorder %s126, %s128
      %p132 = scmp.eq.s32.totalorder %s24, 0
      %p133 = por %p131, %p132
      %p134 = scmp.ne.s32.totalorder %s126, %s128
      %p135 = scmp.eq.s32.totalorder %s29, 1
      %p136 = por %p134, %p135
      %p137 = scmp.ne.s32.totalorder %s128, %s129
      %p138 = scmp.eq.s32.totalorder %s29, 0
      %p139 = por %p137, %p138
      %p140 = scmp.ne.s32.totalorder %s128, %s129
      %p141 = scmp.eq.s32.totalorder %s30, 1
      %p142 = por %p140, %p141
      %p144 = scmp.ne.s32.totalorder %s129, %s143
      %p145 = scmp.eq.s32.totalorder %s30, 0
      %p146 = por %p144, %p145
      %s148 = sadd.s32 %s147, 1
      %p151 = scmp.eq.s32.totalorder %s24, 1
      %p152 = scmp.ne.s32.totalorder %s147, %s149
      %p153 = scmp.eq.s32.totalorder %s24, 0
      %p154 = por %p152, %p153
      %p155 = scmp.ne.s32.totalorder %s147, %s149
      %p156 = scmp.eq.s32.totalorder %s29, 1
      %p157 = por %p155, %p156
      %p158 = scmp.ne.s32.totalorder %s149, %s150
      %p159 = scmp.eq.s32.totalorder %s29, 0
      %p160 = por %p158, %p159
      %p161 = scmp.ne.s32.totalorder %s149, %s150
      %p162 = scmp.eq.s32.totalorder %s30, 1
      %p163 = por %p161, %p162
      %p165 = scmp.ne.s32.totalorder %s150, %s164
      %p166 = scmp.eq.s32.totalorder %s30, 0
      %p167 = por %p165, %p166
      %s169 = sadd.s32 %s168, 1
      %p172 = scmp.eq.s32.totalorder %s24, 1
      %p173 = scmp.ne.s32.totalorder %s168, %s170
      %p174 = scmp.eq.s32.totalorder %s24, 0
      %p175 = por %p173, %p174
      %p176 = scmp.ne.s32.totalorder %s168, %s170
      %p177 = scmp.eq.s32.totalorder %s29, 1
      %p178 = por %p176, %p177
      %p179 = scmp.ne.s32.totalorder %s170, %s171
      %p180 = scmp.eq.s32.totalorder %s29, 0
      %p181 = por %p179, %p180
      %p182 = scmp.ne.s32.totalorder %s170, %s171
      %p183 = scmp.eq.s32.totalorder %s30, 1
      %p184 = por %p182, %p183
      %p186 = scmp.ne.s32.totalorder %s171, %s185
      %p187 = scmp.eq.s32.totalorder %s30, 0
      %p188 = por %p186, %p187
      %s190 = sadd.s32 %s189, 1
      %p193 = scmp.eq.s32.totalorder %s24, 1
      %p194 = scmp.ne.s32.totalorder %s189, %s191
      %p195 = scmp.eq.s32.totalorder %s24, 0
      %p196 = por %p194, %p195
      %p197 = scmp.ne.s32.totalorder %s189, %s191
      %p198 = scmp.eq.s32.totalorder %s29, 1
      %p199 = por %p197, %p198
      %p200 = scmp.ne.s32.totalorder %s191, %s192
      %p201 = scmp.eq.s32.totalorder %s29, 0
      %p202 = por %p200, %p201
      %p203 = scmp.ne.s32.totalorder %s191, %s192
      %p204 = scmp.eq.s32.totalorder %s30, 1
      %p205 = por %p203, %p204
      %p207 = scmp.ne.s32.totalorder %s192, %s206
      %p208 = scmp.eq.s32.totalorder %s30, 0
      %p209 = por %p207, %p208
      %s210 = ssub.s32 %s24, %s31
      %p211 = scmp.eq.s32.totalorder %s210, 0
      %s213 = sadd.s32 %s212, 1
      %s214 = scalar_select %p211, %s212, %s213
      %p217 = pneg %p211
      %p218 = scmp.eq.s32.totalorder %s24, 1
      %p219 = por %p217, %p218
      %p220 = scmp.ne.s32.totalorder %s212, %s215
      %p221 = scmp.eq.s32.totalorder %s24, 0
      %p222 = por %p220, %p221
      %p223 = scmp.ne.s32.totalorder %s212, %s215
      %p224 = scmp.eq.s32.totalorder %s29, 1
      %p225 = por %p223, %p224
      %p226 = scmp.ne.s32.totalorder %s215, %s216
      %p227 = scmp.eq.s32.totalorder %s29, 0
      %p228 = por %p226, %p227
      %p229 = scmp.ne.s32.totalorder %s215, %s216
      %p230 = scmp.eq.s32.totalorder %s30, 1
      %p231 = por %p229, %p230
      %p233 = scmp.ne.s32.totalorder %s216, %s232
      %p234 = scmp.eq.s32.totalorder %s30, 0
      %p235 = por %p233, %p234
      %p236 = scmp.le.s32.totalorder 1, %s24
      %p237 = scmp.lt.s32.totalorder %s24, 3
      %p238 = pnand %p236, %p237
      %p239 = pneg %p238
      // Predicated region
      $region9: #{tpu_custom_call.1} parent=5 // pred_check
        _
      $region10: #{tpu_custom_call.1} parent=5 // pred_check_branch
        %241 = sbr.rel (%p238) target = $region12
      $region11: #{tpu_custom_call.1} parent=5 // pred_region
        %s242 = ssub.s32 %s24, 1
        // Predicated region
        $region13: #{tpu_custom_call.1} parent=11 // pred_check
          %p243 = pneg %p97
        $region14: #{tpu_custom_call.1} parent=11 // pred_check_branch
          %245 = sbr.rel (%p243) target = $region16
        $region15: #{tpu_custom_call.1} parent=11 // pred_region
          %247 = vsyncadd [#allocation6], 0
          %s248 = sshll.u32 %s2, 4
          %s249 = int_to_ptr.hbm [resolvable:$true] %s248
          %s250 = sshll.u32 [#allocation7], 4
          %s251 = int_to_ptr.vmem [resolvable:$true] %s250
          %256 = dma.hbm_to_vmem [thread:$0]  %s249, 12288, %s251, [#allocation6], 768, 768, 48
        $region16: #{tpu_custom_call.1} parent=11 // pred_fallthru
          _
        // Predicated region
        $region17: #{tpu_custom_call.1} parent=11 // pred_check
          %p257 = pneg %p118
        $region18: #{tpu_custom_call.1} parent=11 // pred_check_branch
          %259 = sbr.rel (%p257) target = $region20
        $region19: #{tpu_custom_call.1} parent=11 // pred_region
          %261 = vsyncadd [#allocation9], 0
          %s263 = sshll.u32 %s3, 4
          %s264 = int_to_ptr.hbm [resolvable:$true] %s263
          %s265 = sshll.u32 [#allocation8], 4
          %s266 = int_to_ptr.vmem [resolvable:$true] %s265
          %268 = dma.hbm_to_vmem [thread:$0]  %s264, 192, %s266, [#allocation9]
        $region20: #{tpu_custom_call.1} parent=11 // pred_fallthru
          _
        // Predicated region
        $region21: #{tpu_custom_call.1} parent=11 // pred_check
          %p269 = pneg %p139
        $region22: #{tpu_custom_call.1} parent=11 // pred_check_branch
          %271 = sbr.rel (%p269) target = $region24
        $region23: #{tpu_custom_call.1} parent=11 // pred_region
          %273 = vsyncadd [#allocation9], 0
          %s274 = sshll.u32 %s4, 4
          %s275 = int_to_ptr.hbm [resolvable:$true] %s274
          %s276 = sshll.u32 [#allocation10], 4
          %s277 = int_to_ptr.vmem [resolvable:$true] %s276
          %282 = dma.hbm_to_vmem [thread:$0]  %s275, 4096, %s277, [#allocation9], 64, 64, 4
        $region24: #{tpu_custom_call.1} parent=11 // pred_fallthru
          _
        // Predicated region
        $region25: #{tpu_custom_call.1} parent=11 // pred_check
          %p283 = pneg %p160
        $region26: #{tpu_custom_call.1} parent=11 // pred_check_branch
          %285 = sbr.rel (%p283) target = $region28
        $region27: #{tpu_custom_call.1} parent=11 // pred_region
          _
        $region28: #{tpu_custom_call.1} parent=11 // pred_fallthru
          _
        // Predicated region
        $region29: #{tpu_custom_call.1} parent=11 // pred_check
          %p286 = pneg %p181
        $region30: #{tpu_custom_call.1} parent=11 // pred_check_branch
          %288 = sbr.rel (%p286) target = $region32
        $region31: #{tpu_custom_call.1} parent=11 // pred_region
          _
        $region32: #{tpu_custom_call.1} parent=11 // pred_fallthru
          _
        // Predicated region
        $region33: #{tpu_custom_call.1} parent=11 // pred_check
          %p289 = pneg %p202
        $region34: #{tpu_custom_call.1} parent=11 // pred_check_branch
          %291 = sbr.rel (%p289) target = $region36
        $region35: #{tpu_custom_call.1} parent=11 // pred_region
          _
        $region36: #{tpu_custom_call.1} parent=11 // pred_fallthru
          _
      $region12: #{tpu_custom_call.1} parent=5 // pred_fallthru
        _
      %p292 = scmp.lt.s32.totalorder %s24, 2
      // Predicated region
      $region37: #{tpu_custom_call.1} parent=5 // pred_check
        %p293 = pneg %p292
      $region38: #{tpu_custom_call.1} parent=5 // pred_check_branch
        %295 = sbr.rel (%p293) target = $region40
      $region39: #{tpu_custom_call.1} parent=5 // pred_region
        // Predicated region
        $region41: #{tpu_custom_call.1} parent=39 // pred_check
          %p296 = pneg %p44
        $region42: #{tpu_custom_call.1} parent=39 // pred_check_branch
          %298 = sbr.rel (%p296) target = $region44
        $region43: #{tpu_custom_call.1} parent=39 // pred_region
          %s299 = sand.u32 %s34, 1
          %s300 = scalar_lea.sflag [#allocation3], %s299
          %s301 = sand.u32 %s34, 1
          %s302 = smul.addr %s301, 4
          %s303 = scalar_lea.vmem [#allocation2], %s302
          %305 = vsyncadd %s300, 0
          %s306 = smul.addr %s24, 4
          %s307 = scalar_lea.hbm %s0, %s306
          %s309 = sshll.u32 %s307, 4
          %s310 = int_to_ptr.hbm [resolvable:$true] %s309
          %s311 = sshll.u32 %s303, 4
          %s312 = int_to_ptr.vmem [resolvable:$true] %s311
          %314 = dma.hbm_to_vmem [thread:$0]  %s310, 64, %s312, %s300
        $region44: #{tpu_custom_call.1} parent=39 // pred_fallthru
          _
        // Predicated region
        $region45: #{tpu_custom_call.1} parent=39 // pred_check
          %p315 = pneg %p70
        $region46: #{tpu_custom_call.1} parent=39 // pred_check_branch
          %317 = sbr.rel (%p315) target = $region48
        $region47: #{tpu_custom_call.1} parent=39 // pred_region
          %s318 = sand.u32 %s24, 1
          %s319 = scalar_lea.sflag [#allocation6], %s318
          %s320 = sand.u32 %s60, 1
          %s321 = scalar_lea.vmem [#allocation5], %s320
          %323 = vsyncadd %s319, 0
          %s324 = scalar_lea.hbm %s1, %s24
          %s326 = sshll.u32 %s324, 4
          %s327 = int_to_ptr.hbm [resolvable:$true] %s326
          %s328 = sshll.u32 %s321, 4
          %s329 = int_to_ptr.vmem [resolvable:$true] %s328
          %331 = dma.hbm_to_vmem [thread:$0]  %s327, 16, %s329, %s319
        $region48: #{tpu_custom_call.1} parent=39 // pred_fallthru
          _
      $region40: #{tpu_custom_call.1} parent=5 // pred_fallthru
        _
      %p332 = scmp.le.s32.totalorder 1, %s24
      %p333 = scmp.lt.s32.totalorder %s24, 3
      %p334 = pnand %p332, %p333
      %p335 = pneg %p334
      // Predicated region
      $region49: #{tpu_custom_call.1} parent=5 // pred_check
        _
      $region50: #{tpu_custom_call.1} parent=5 // pred_check_branch
        %337 = sbr.rel (%p334) target = $region52
      $region51: #{tpu_custom_call.1} parent=5 // pred_region
        %s338 = ssub.s32 %s24, 1
        %s339 = sand.u32 %s37, 1
        %s340 = scalar_lea.sflag [#allocation3], %s339
        %s341 = sand.u32 %s37, 1
        %s342 = smul.addr %s341, 4
        %s343 = scalar_lea.vmem [#allocation2], %s342
        // Predicated region
        $region53: #{tpu_custom_call.1} parent=51 // pred_check
          %p344 = pneg %p50
        $region54: #{tpu_custom_call.1} parent=51 // pred_check_branch
          %346 = sbr.rel (%p344) target = $region56
        $region55: #{tpu_custom_call.1} parent=51 // pred_region
          %348 = dma.done %s340, 64
        $region56: #{tpu_custom_call.1} parent=51 // pred_fallthru
          _
        %s349 = sand.u32 %s29, 1
        %s350 = scalar_lea.sflag [#allocation6], %s349
        %s351 = sand.u32 %s63, 1
        %s352 = scalar_lea.vmem [#allocation5], %s351
        // Predicated region
        $region57: #{tpu_custom_call.1} parent=51 // pred_check
          %p353 = pneg %p76
        $region58: #{tpu_custom_call.1} parent=51 // pred_check_branch
          %355 = sbr.rel (%p353) target = $region60
        $region59: #{tpu_custom_call.1} parent=51 // pred_region
          %357 = dma.done %s350, 16
        $region60: #{tpu_custom_call.1} parent=51 // pred_fallthru
          _
        // Predicated region
        $region61: #{tpu_custom_call.1} parent=51 // pred_check
          %p358 = pneg %p97
        $region62: #{tpu_custom_call.1} parent=51 // pred_check_branch
          %360 = sbr.rel (%p358) target = $region64
        $region63: #{tpu_custom_call.1} parent=51 // pred_region
          %362 = dma.done [#allocation6], 12288
        $region64: #{tpu_custom_call.1} parent=51 // pred_fallthru
          _
        // Predicated region
        $region65: #{tpu_custom_call.1} parent=51 // pred_check
          %p363 = pneg %p118
        $region66: #{tpu_custom_call.1} parent=51 // pred_check_branch
          %365 = sbr.rel (%p363) target = $region68
        $region67: #{tpu_custom_call.1} parent=51 // pred_region
          %367 = dma.done [#allocation9], 192
        $region68: #{tpu_custom_call.1} parent=51 // pred_fallthru
          _
        // Predicated region
        $region69: #{tpu_custom_call.1} parent=51 // pred_check
          %p368 = pneg %p139
        $region70: #{tpu_custom_call.1} parent=51 // pred_check_branch
          %370 = sbr.rel (%p368) target = $region72
        $region71: #{tpu_custom_call.1} parent=51 // pred_region
          %372 = dma.done [#allocation9], 4096
        $region72: #{tpu_custom_call.1} parent=51 // pred_fallthru
          _
        %s373 = sand.u32 %s37, 1
        %s374 = scalar_lea.sflag [#allocation3], %s373
        %s375 = sand.u32 %s37, 1
        %s376 = smul.addr %s375, 4
        %s377 = scalar_lea.vmem [#allocation2], %s376
        %p378 = pneg %p50
        %p379 = pneg %p47
        %s380 = sand.u32 %s29, 1
        %s381 = scalar_lea.sflag [#allocation6], %s380
        %s382 = sand.u32 %s63, 1
        %s383 = scalar_lea.vmem [#allocation5], %s382
        %p384 = pneg %p76
        %p385 = pneg %p73
        %p386 = pneg %p97
        %p387 = pneg %p94
        %p388 = pneg %p118
        %p389 = pneg %p115
        %p390 = pneg %p139
        %p391 = pneg %p136
        %p392 = pneg %p160
        %p393 = pneg %p157
        %p394 = pneg %p181
        %p395 = pneg %p178
        %p396 = pneg %p202
        %p397 = pneg %p199
        %p398 = pneg %p228
        %p399 = pneg %p225
        %s400 = sand.u32 %s215, 1
        %s401 = scalar_lea.sflag [#allocation4], %s400
        %s402 = sand.u32 %s215, 1
        %s403 = smul.addr %s402, 8
        %s404 = scalar_lea.vmem [#allocation11], %s403
        %v406 = vld [vmem:[%s343] sm:$0xf]
        %v407 = vld [vmem:[#allocation7] sm:$0xff]
        %v408 = vld [vmem:[#allocation7 + $0x8] sm:$0xff]
        %v409 = vld [vmem:[#allocation7 + $0x10] sm:$0xff]
        %v410 = vld [vmem:[#allocation7 + $0x18] sm:$0xff]
        %v411 = vld [vmem:[#allocation7 + $0x20] sm:$0xff]
        %v412 = vld [vmem:[#allocation7 + $0x28] sm:$0xff]
        %v413 = vld [vmem:[#allocation7 + $0x30] sm:$0xff]
        %v414 = vld [vmem:[#allocation7 + $0x38] sm:$0xff]
        %v415 = vld [vmem:[#allocation7 + $0x40] sm:$0xff]
        %v416 = vld [vmem:[#allocation7 + $0x48] sm:$0xff]
        %v417 = vld [vmem:[#allocation7 + $0x50] sm:$0xff]
        %v418 = vld [vmem:[#allocation7 + $0x58] sm:$0xff]
        %v419 = vld [vmem:[#allocation7 + $0x60] sm:$0xff]
        %v420 = vld [vmem:[#allocation7 + $0x68] sm:$0xff]
        %v421 = vld [vmem:[#allocation7 + $0x70] sm:$0xff]
        %v422 = vld [vmem:[#allocation7 + $0x78] sm:$0xff]
        %v423 = vld [vmem:[#allocation7 + $0x80] sm:$0xff]
        %v424 = vld [vmem:[#allocation7 + $0x88] sm:$0xff]
        %v425 = vld [vmem:[#allocation7 + $0x90] sm:$0xff]
        %v426 = vld [vmem:[#allocation7 + $0x98] sm:$0xff]
        %v427 = vld [vmem:[#allocation7 + $0xa0] sm:$0xff]
        %v428 = vld [vmem:[#allocation7 + $0xa8] sm:$0xff]
        %v429 = vld [vmem:[#allocation7 + $0xb0] sm:$0xff]
        %v430 = vld [vmem:[#allocation7 + $0xb8] sm:$0xff]
        %v431 = vld [vmem:[#allocation7 + $0xc0] sm:$0xff]
        %v432 = vld [vmem:[#allocation7 + $0xc8] sm:$0xff]
        %v433 = vld [vmem:[#allocation7 + $0xd0] sm:$0xff]
        %v434 = vld [vmem:[#allocation7 + $0xd8] sm:$0xff]
        %v435 = vld [vmem:[#allocation7 + $0xe0] sm:$0xff]
        %v436 = vld [vmem:[#allocation7 + $0xe8] sm:$0xff]
        %v437 = vld [vmem:[#allocation7 + $0xf0] sm:$0xff]
        %v438 = vld [vmem:[#allocation7 + $0xf8] sm:$0xff]
        %v439 = vld [vmem:[#allocation7 + $0x100] sm:$0xff]
        %v440 = vld [vmem:[#allocation7 + $0x108] sm:$0xff]
        %v441 = vld [vmem:[#allocation7 + $0x110] sm:$0xff]
        %v442 = vld [vmem:[#allocation7 + $0x118] sm:$0xff]
        %v443 = vld [vmem:[#allocation7 + $0x120] sm:$0xff]
        %v444 = vld [vmem:[#allocation7 + $0x128] sm:$0xff]
        %v445 = vld [vmem:[#allocation7 + $0x130] sm:$0xff]
        %v446 = vld [vmem:[#allocation7 + $0x138] sm:$0xff]
        %v447 = vld [vmem:[#allocation7 + $0x140] sm:$0xff]
        %v448 = vld [vmem:[#allocation7 + $0x148] sm:$0xff]
        %v449 = vld [vmem:[#allocation7 + $0x150] sm:$0xff]
        %v450 = vld [vmem:[#allocation7 + $0x158] sm:$0xff]
        %v451 = vld [vmem:[#allocation7 + $0x160] sm:$0xff]
        %v452 = vld [vmem:[#allocation7 + $0x168] sm:$0xff]
        %v453 = vld [vmem:[#allocation7 + $0x170] sm:$0xff]
        %v454 = vld [vmem:[#allocation7 + $0x178] sm:$0xff]
        %v455 = vld [vmem:[#allocation7 + $0x180] sm:$0xff]
        %v456 = vld [vmem:[#allocation7 + $0x188] sm:$0xff]
        %v457 = vld [vmem:[#allocation7 + $0x190] sm:$0xff]
        %v458 = vld [vmem:[#allocation7 + $0x198] sm:$0xff]
        %v459 = vld [vmem:[#allocation7 + $0x1a0] sm:$0xff]
        %v460 = vld [vmem:[#allocation7 + $0x1a8] sm:$0xff]
        %v461 = vld [vmem:[#allocation7 + $0x1b0] sm:$0xff]
        %v462 = vld [vmem:[#allocation7 + $0x1b8] sm:$0xff]
        %v463 = vld [vmem:[#allocation7 + $0x1c0] sm:$0xff]
        %v464 = vld [vmem:[#allocation7 + $0x1c8] sm:$0xff]
        %v465 = vld [vmem:[#allocation7 + $0x1d0] sm:$0xff]
        %v466 = vld [vmem:[#allocation7 + $0x1d8] sm:$0xff]
        %v467 = vld [vmem:[#allocation7 + $0x1e0] sm:$0xff]
        %v468 = vld [vmem:[#allocation7 + $0x1e8] sm:$0xff]
        %v469 = vld [vmem:[#allocation7 + $0x1f0] sm:$0xff]
        %v470 = vld [vmem:[#allocation7 + $0x1f8] sm:$0xff]
        %v471 = vld [vmem:[#allocation7 + $0x200] sm:$0xff]
        %v472 = vld [vmem:[#allocation7 + $0x208] sm:$0xff]
        %v473 = vld [vmem:[#allocation7 + $0x210] sm:$0xff]
        %v474 = vld [vmem:[#allocation7 + $0x218] sm:$0xff]
        %v475 = vld [vmem:[#allocation7 + $0x220] sm:$0xff]
        %v476 = vld [vmem:[#allocation7 + $0x228] sm:$0xff]
        %v477 = vld [vmem:[#allocation7 + $0x230] sm:$0xff]
        %v478 = vld [vmem:[#allocation7 + $0x238] sm:$0xff]
        %v479 = vld [vmem:[#allocation7 + $0x240] sm:$0xff]
        %v480 = vld [vmem:[#allocation7 + $0x248] sm:$0xff]
        %v481 = vld [vmem:[#allocation7 + $0x250] sm:$0xff]
        %v482 = vld [vmem:[#allocation7 + $0x258] sm:$0xff]
        %v483 = vld [vmem:[#allocation7 + $0x260] sm:$0xff]
        %v484 = vld [vmem:[#allocation7 + $0x268] sm:$0xff]
        %v485 = vld [vmem:[#allocation7 + $0x270] sm:$0xff]
        %v486 = vld [vmem:[#allocation7 + $0x278] sm:$0xff]
        %v487 = vld [vmem:[#allocation7 + $0x280] sm:$0xff]
        %v488 = vld [vmem:[#allocation7 + $0x288] sm:$0xff]
        %v489 = vld [vmem:[#allocation7 + $0x290] sm:$0xff]
        %v490 = vld [vmem:[#allocation7 + $0x298] sm:$0xff]
        %v491 = vld [vmem:[#allocation7 + $0x2a0] sm:$0xff]
        %v492 = vld [vmem:[#allocation7 + $0x2a8] sm:$0xff]
        %v493 = vld [vmem:[#allocation7 + $0x2b0] sm:$0xff]
        %v494 = vld [vmem:[#allocation7 + $0x2b8] sm:$0xff]
        %v495 = vld [vmem:[#allocation7 + $0x2c0] sm:$0xff]
        %v496 = vld [vmem:[#allocation7 + $0x2c8] sm:$0xff]
        %v497 = vld [vmem:[#allocation7 + $0x2d0] sm:$0xff]
        %v498 = vld [vmem:[#allocation7 + $0x2d8] sm:$0xff]
        %v499 = vld [vmem:[#allocation7 + $0x2e0] sm:$0xff]
        %v500 = vld [vmem:[#allocation7 + $0x2e8] sm:$0xff]
        %v501 = vld [vmem:[#allocation7 + $0x2f0] sm:$0xff]
        %v502 = vld [vmem:[#allocation7 + $0x2f8] sm:$0xff]
        %v503 = vld [vmem:[#allocation8] sm:$0xff]
        %v504 = vld [vmem:[#allocation8 + $0x8] sm:$0xf]
        %v507 = vperm.slane %v503, 0
        %v508 = vperm.slane %v503, 1
        %v509 = vperm.slane %v503, 2
        %v510 = vperm.slane %v503, 3
        %v511 = vperm.slane %v503, 4
        %v512 = vperm.slane %v503, 5
        %v513 = vperm.slane %v503, 6
        %v514 = vperm.slane %v503, 7
        %v515 = vperm.slane %v504, 0
        %v516 = vperm.slane %v504, 1
        %v517 = vperm.slane %v504, 2
        %v518 = vperm.slane %v504, 3
        %v627 = vunpack.c.l.b16 %v407
        %v628 = vunpack.c.h.b16 %v407
        %v629 = vunpack.c.l.b16 %v408
        %v630 = vunpack.c.h.b16 %v408
        %v631 = vunpack.c.l.b16 %v409
        %v632 = vunpack.c.h.b16 %v409
        %v633 = vunpack.c.l.b16 %v410
        %v634 = vunpack.c.h.b16 %v410
        %v635 = vunpack.c.l.b16 %v411
        %v636 = vunpack.c.h.b16 %v411
        %v637 = vunpack.c.l.b16 %v412
        %v638 = vunpack.c.h.b16 %v412
        %v639 = vunpack.c.l.b16 %v413
        %v640 = vunpack.c.h.b16 %v413
        %v641 = vunpack.c.l.b16 %v414
        %v642 = vunpack.c.h.b16 %v414
        %v643 = vunpack.c.l.b16 %v415
        %v644 = vunpack.c.h.b16 %v415
        %v645 = vunpack.c.l.b16 %v416
        %v646 = vunpack.c.h.b16 %v416
        %v647 = vunpack.c.l.b16 %v417
        %v648 = vunpack.c.h.b16 %v417
        %v649 = vunpack.c.l.b16 %v418
        %v650 = vunpack.c.h.b16 %v418
        %v651 = vunpack.c.l.b16 %v419
        %v652 = vunpack.c.h.b16 %v419
        %v653 = vunpack.c.l.b16 %v420
        %v654 = vunpack.c.h.b16 %v420
        %v655 = vunpack.c.l.b16 %v421
        %v656 = vunpack.c.h.b16 %v421
        %v657 = vunpack.c.l.b16 %v422
        %v658 = vunpack.c.h.b16 %v422
        %v659 = vunpack.c.l.b16 %v423
        %v660 = vunpack.c.h.b16 %v423
        %v661 = vunpack.c.l.b16 %v424
        %v662 = vunpack.c.h.b16 %v424
        %v663 = vunpack.c.l.b16 %v425
        %v664 = vunpack.c.h.b16 %v425
        %v665 = vunpack.c.l.b16 %v426
        %v666 = vunpack.c.h.b16 %v426
        %v667 = vunpack.c.l.b16 %v427
        %v668 = vunpack.c.h.b16 %v427
        %v669 = vunpack.c.l.b16 %v428
        %v670 = vunpack.c.h.b16 %v428
        %v671 = vunpack.c.l.b16 %v429
        %v672 = vunpack.c.h.b16 %v429
        %v673 = vunpack.c.l.b16 %v430
        %v674 = vunpack.c.h.b16 %v430
        %v675 = vunpack.c.l.b16 %v431
        %v676 = vunpack.c.h.b16 %v431
        %v677 = vunpack.c.l.b16 %v432
        %v678 = vunpack.c.h.b16 %v432
        %v679 = vunpack.c.l.b16 %v433
        %v680 = vunpack.c.h.b16 %v433
        %v681 = vunpack.c.l.b16 %v434
        %v682 = vunpack.c.h.b16 %v434
        %v683 = vunpack.c.l.b16 %v435
        %v684 = vunpack.c.h.b16 %v435
        %v685 = vunpack.c.l.b16 %v436
        %v686 = vunpack.c.h.b16 %v436
        %v687 = vunpack.c.l.b16 %v437
        %v688 = vunpack.c.h.b16 %v437
        %v689 = vunpack.c.l.b16 %v438
        %v690 = vunpack.c.h.b16 %v438
        %v691 = vunpack.c.l.b16 %v439
        %v692 = vunpack.c.h.b16 %v439
        %v693 = vunpack.c.l.b16 %v440
        %v694 = vunpack.c.h.b16 %v440
        %v695 = vunpack.c.l.b16 %v441
        %v696 = vunpack.c.h.b16 %v441
        %v697 = vunpack.c.l.b16 %v442
        %v698 = vunpack.c.h.b16 %v442
        %v699 = vunpack.c.l.b16 %v443
        %v700 = vunpack.c.h.b16 %v443
        %v701 = vunpack.c.l.b16 %v444
        %v702 = vunpack.c.h.b16 %v444
        %v703 = vunpack.c.l.b16 %v445
        %v704 = vunpack.c.h.b16 %v445
        %v705 = vunpack.c.l.b16 %v446
        %v706 = vunpack.c.h.b16 %v446
        %v707 = vunpack.c.l.b16 %v447
        %v708 = vunpack.c.h.b16 %v447
        %v709 = vunpack.c.l.b16 %v448
        %v710 = vunpack.c.h.b16 %v448
        %v711 = vunpack.c.l.b16 %v449
        %v712 = vunpack.c.h.b16 %v449
        %v713 = vunpack.c.l.b16 %v450
        %v714 = vunpack.c.h.b16 %v450
        %v715 = vunpack.c.l.b16 %v451
        %v716 = vunpack.c.h.b16 %v451
        %v717 = vunpack.c.l.b16 %v452
        %v718 = vunpack.c.h.b16 %v452
        %v719 = vunpack.c.l.b16 %v453
        %v720 = vunpack.c.h.b16 %v453
        %v721 = vunpack.c.l.b16 %v454
        %v722 = vunpack.c.h.b16 %v454
        %v723 = vunpack.c.l.b16 %v455
        %v724 = vunpack.c.h.b16 %v455
        %v725 = vunpack.c.l.b16 %v456
        %v726 = vunpack.c.h.b16 %v456
        %v727 = vunpack.c.l.b16 %v457
        %v728 = vunpack.c.h.b16 %v457
        %v729 = vunpack.c.l.b16 %v458
        %v730 = vunpack.c.h.b16 %v458
        %v731 = vunpack.c.l.b16 %v459
        %v732 = vunpack.c.h.b16 %v459
        %v733 = vunpack.c.l.b16 %v460
        %v734 = vunpack.c.h.b16 %v460
        %v735 = vunpack.c.l.b16 %v461
        %v736 = vunpack.c.h.b16 %v461
        %v737 = vunpack.c.l.b16 %v462
        %v738 = vunpack.c.h.b16 %v462
        %v739 = vunpack.c.l.b16 %v463
        %v740 = vunpack.c.h.b16 %v463
        %v741 = vunpack.c.l.b16 %v464
        %v742 = vunpack.c.h.b16 %v464
        %v743 = vunpack.c.l.b16 %v465
        %v744 = vunpack.c.h.b16 %v465
        %v745 = vunpack.c.l.b16 %v466
        %v746 = vunpack.c.h.b16 %v466
        %v747 = vunpack.c.l.b16 %v467
        %v748 = vunpack.c.h.b16 %v467
        %v749 = vunpack.c.l.b16 %v468
        %v750 = vunpack.c.h.b16 %v468
        %v751 = vunpack.c.l.b16 %v469
        %v752 = vunpack.c.h.b16 %v469
        %v753 = vunpack.c.l.b16 %v470
        %v754 = vunpack.c.h.b16 %v470
        %v755 = vunpack.c.l.b16 %v471
        %v756 = vunpack.c.h.b16 %v471
        %v757 = vunpack.c.l.b16 %v472
        %v758 = vunpack.c.h.b16 %v472
        %v759 = vunpack.c.l.b16 %v473
        %v760 = vunpack.c.h.b16 %v473
        %v761 = vunpack.c.l.b16 %v474
        %v762 = vunpack.c.h.b16 %v474
        %v763 = vunpack.c.l.b16 %v475
        %v764 = vunpack.c.h.b16 %v475
        %v765 = vunpack.c.l.b16 %v476
        %v766 = vunpack.c.h.b16 %v476
        %v767 = vunpack.c.l.b16 %v477
        %v768 = vunpack.c.h.b16 %v477
        %v769 = vunpack.c.l.b16 %v478
        %v770 = vunpack.c.h.b16 %v478
        %v771 = vunpack.c.l.b16 %v479
        %v772 = vunpack.c.h.b16 %v479
        %v773 = vunpack.c.l.b16 %v480
        %v774 = vunpack.c.h.b16 %v480
        %v775 = vunpack.c.l.b16 %v481
        %v776 = vunpack.c.h.b16 %v481
        %v777 = vunpack.c.l.b16 %v482
        %v778 = vunpack.c.h.b16 %v482
        %v779 = vunpack.c.l.b16 %v483
        %v780 = vunpack.c.h.b16 %v483
        %v781 = vunpack.c.l.b16 %v484
        %v782 = vunpack.c.h.b16 %v484
        %v783 = vunpack.c.l.b16 %v485
        %v784 = vunpack.c.h.b16 %v485
        %v785 = vunpack.c.l.b16 %v486
        %v786 = vunpack.c.h.b16 %v486
        %v787 = vunpack.c.l.b16 %v487
        %v788 = vunpack.c.h.b16 %v487
        %v789 = vunpack.c.l.b16 %v488
        %v790 = vunpack.c.h.b16 %v488
        %v791 = vunpack.c.l.b16 %v489
        %v792 = vunpack.c.h.b16 %v489
        %v793 = vunpack.c.l.b16 %v490
        %v794 = vunpack.c.h.b16 %v490
        %v795 = vunpack.c.l.b16 %v491
        %v796 = vunpack.c.h.b16 %v491
        %v797 = vunpack.c.l.b16 %v492
        %v798 = vunpack.c.h.b16 %v492
        %v799 = vunpack.c.l.b16 %v493
        %v800 = vunpack.c.h.b16 %v493
        %v801 = vunpack.c.l.b16 %v494
        %v802 = vunpack.c.h.b16 %v494
        %v803 = vunpack.c.l.b16 %v495
        %v804 = vunpack.c.h.b16 %v495
        %v805 = vunpack.c.l.b16 %v496
        %v806 = vunpack.c.h.b16 %v496
        %v807 = vunpack.c.l.b16 %v497
        %v808 = vunpack.c.h.b16 %v497
        %v809 = vunpack.c.l.b16 %v498
        %v810 = vunpack.c.h.b16 %v498
        %v811 = vunpack.c.l.b16 %v499
        %v812 = vunpack.c.h.b16 %v499
        %v813 = vunpack.c.l.b16 %v500
        %v814 = vunpack.c.h.b16 %v500
        %v815 = vunpack.c.l.b16 %v501
        %v816 = vunpack.c.h.b16 %v501
        %v817 = vunpack.c.l.b16 %v502
        %v818 = vunpack.c.h.b16 %v502
        %v819 = vpack.c.b16 %v639, %v627
        %v820 = vpack.c.b16 %v640, %v628
        %v821 = vpack.c.b16 %v641, %v629
        %v822 = vpack.c.b16 %v642, %v630
        %v823 = vpack.c.b16 %v643, %v631
        %v824 = vpack.c.b16 %v644, %v632
        %v825 = vpack.c.b16 %v645, %v633
        %v826 = vpack.c.b16 %v646, %v634
        %v827 = vpack.c.b16 %v647, %v635
        %v828 = vpack.c.b16 %v648, %v636
        %v829 = vpack.c.b16 %v649, %v637
        %v830 = vpack.c.b16 %v650, %v638
        %v831 = vpack.c.b16 %v663, %v651
        %v832 = vpack.c.b16 %v664, %v652
        %v833 = vpack.c.b16 %v665, %v653
        %v834 = vpack.c.b16 %v666, %v654
        %v835 = vpack.c.b16 %v667, %v655
        %v836 = vpack.c.b16 %v668, %v656
        %v837 = vpack.c.b16 %v669, %v657
        %v838 = vpack.c.b16 %v670, %v658
        %v839 = vpack.c.b16 %v671, %v659
        %v840 = vpack.c.b16 %v672, %v660
        %v841 = vpack.c.b16 %v673, %v661
        %v842 = vpack.c.b16 %v674, %v662
        %v843 = vpack.c.b16 %v687, %v675
        %v844 = vpack.c.b16 %v688, %v676
        %v845 = vpack.c.b16 %v689, %v677
        %v846 = vpack.c.b16 %v690, %v678
        %v847 = vpack.c.b16 %v691, %v679
        %v848 = vpack.c.b16 %v692, %v680
        %v849 = vpack.c.b16 %v693, %v681
        %v850 = vpack.c.b16 %v694, %v682
        %v851 = vpack.c.b16 %v695, %v683
        %v852 = vpack.c.b16 %v696, %v684
        %v853 = vpack.c.b16 %v697, %v685
        %v854 = vpack.c.b16 %v698, %v686
        %v855 = vpack.c.b16 %v711, %v699
        %v856 = vpack.c.b16 %v712, %v700
        %v857 = vpack.c.b16 %v713, %v701
        %v858 = vpack.c.b16 %v714, %v702
        %v859 = vpack.c.b16 %v715, %v703
        %v860 = vpack.c.b16 %v716, %v704
        %v861 = vpack.c.b16 %v717, %v705
        %v862 = vpack.c.b16 %v718, %v706
        %v863 = vpack.c.b16 %v719, %v707
        %v864 = vpack.c.b16 %v720, %v708
        %v865 = vpack.c.b16 %v721, %v709
        %v866 = vpack.c.b16 %v722, %v710
        %v867 = vpack.c.b16 %v735, %v723
        %v868 = vpack.c.b16 %v736, %v724
        %v869 = vpack.c.b16 %v737, %v725
        %v870 = vpack.c.b16 %v738, %v726
        %v871 = vpack.c.b16 %v739, %v727
        %v872 = vpack.c.b16 %v740, %v728
        %v873 = vpack.c.b16 %v741, %v729
        %v874 = vpack.c.b16 %v742, %v730
        %v875 = vpack.c.b16 %v743, %v731
        %v876 = vpack.c.b16 %v744, %v732
        %v877 = vpack.c.b16 %v745, %v733
        %v878 = vpack.c.b16 %v746, %v734
        %v879 = vpack.c.b16 %v759, %v747
        %v880 = vpack.c.b16 %v760, %v748
        %v881 = vpack.c.b16 %v761, %v749
        %v882 = vpack.c.b16 %v762, %v750
        %v883 = vpack.c.b16 %v763, %v751
        %v884 = vpack.c.b16 %v764, %v752
        %v885 = vpack.c.b16 %v765, %v753
        %v886 = vpack.c.b16 %v766, %v754
        %v887 = vpack.c.b16 %v767, %v755
        %v888 = vpack.c.b16 %v768, %v756
        %v889 = vpack.c.b16 %v769, %v757
        %v890 = vpack.c.b16 %v770, %v758
        %v891 = vpack.c.b16 %v783, %v771
        %v892 = vpack.c.b16 %v784, %v772
        %v893 = vpack.c.b16 %v785, %v773
        %v894 = vpack.c.b16 %v786, %v774
        %v895 = vpack.c.b16 %v787, %v775
        %v896 = vpack.c.b16 %v788, %v776
        %v897 = vpack.c.b16 %v789, %v777
        %v898 = vpack.c.b16 %v790, %v778
        %v899 = vpack.c.b16 %v791, %v779
        %v900 = vpack.c.b16 %v792, %v780
        %v901 = vpack.c.b16 %v793, %v781
        %v902 = vpack.c.b16 %v794, %v782
        %v903 = vpack.c.b16 %v807, %v795
        %v904 = vpack.c.b16 %v808, %v796
        %v905 = vpack.c.b16 %v809, %v797
        %v906 = vpack.c.b16 %v810, %v798
        %v907 = vpack.c.b16 %v811, %v799
        %v908 = vpack.c.b16 %v812, %v800
        %v909 = vpack.c.b16 %v813, %v801
        %v910 = vpack.c.b16 %v814, %v802
        %v911 = vpack.c.b16 %v815, %v803
        %v912 = vpack.c.b16 %v816, %v804
        %v913 = vpack.c.b16 %v817, %v805
        %v914 = vpack.c.b16 %v818, %v806
        %1011 = vmatpush.bf16.msra.mxu0 %v903
        %1012 = vmatpush.bf16.msra.mxu0 %v891
        %1013 = vmatpush.bf16.msra.mxu0 %v879
        %1014 = vmatpush.bf16.msra.mxu0 %v867
        %1015 = vmatpush.bf16.msra.mxu0 %v855
        %1016 = vmatpush.bf16.msra.mxu0 %v843
        %1017 = vmatpush.bf16.msra.mxu0 %v831
        %1018 = vmatpush.bf16.msra.mxu0 %v819
        %1019 = vmatmul.bf16.gmra.mxu0 %v406
        %v1020 = vpop.f32.mrf.mxu0
        %v1021 = vadd.f32 %v507, %v1020
        %v1022 = vpop.f32.mrf.mxu0
        %1023 = vdwg.mxu0
        %1024 = vmatpush.bf16.msra.mxu0 %v904
        %1025 = vmatpush.bf16.msra.mxu0 %v892
        %1026 = vmatpush.bf16.msra.mxu0 %v880
        %1027 = vmatpush.bf16.msra.mxu0 %v868
        %1028 = vmatpush.bf16.msra.mxu0 %v856
        %1029 = vmatpush.bf16.msra.mxu0 %v844
        %1030 = vmatpush.bf16.msra.mxu0 %v832
        %1031 = vmatpush.bf16.msra.mxu0 %v820
        %1032 = vmatmul.bf16.gmra.mxu0 %v406
        %v1033 = vpop.f32.mrf.mxu0
        %v1034 = vadd.f32 %v508, %v1033
        %v1035 = vpop.f32.mrf.mxu0
        %1036 = vdwg.mxu0
        %1037 = vmatpush.bf16.msra.mxu0 %v905
        %1038 = vmatpush.bf16.msra.mxu0 %v893
        %1039 = vmatpush.bf16.msra.mxu0 %v881
        %1040 = vmatpush.bf16.msra.mxu0 %v869
        %1041 = vmatpush.bf16.msra.mxu0 %v857
        %1042 = vmatpush.bf16.msra.mxu0 %v845
        %1043 = vmatpush.bf16.msra.mxu0 %v833
        %1044 = vmatpush.bf16.msra.mxu0 %v821
        %1045 = vmatmul.bf16.gmra.mxu0 %v406
        %v1046 = vpop.f32.mrf.mxu0
        %v1047 = vadd.f32 %v509, %v1046
        %v1048 = vpop.f32.mrf.mxu0
        %1049 = vdwg.mxu0
        %1050 = vmatpush.bf16.msra.mxu0 %v906
        %1051 = vmatpush.bf16.msra.mxu0 %v894
        %1052 = vmatpush.bf16.msra.mxu0 %v882
        %1053 = vmatpush.bf16.msra.mxu0 %v870
        %1054 = vmatpush.bf16.msra.mxu0 %v858
        %1055 = vmatpush.bf16.msra.mxu0 %v846
        %1056 = vmatpush.bf16.msra.mxu0 %v834
        %1057 = vmatpush.bf16.msra.mxu0 %v822
        %1058 = vmatmul.bf16.gmra.mxu0 %v406
        %v1059 = vpop.f32.mrf.mxu0
        %v1060 = vadd.f32 %v510, %v1059
        %v1061 = vpop.f32.mrf.mxu0
        %1062 = vdwg.mxu0
        %1063 = vmatpush.bf16.msra.mxu0 %v907
        %1064 = vmatpush.bf16.msra.mxu0 %v895
        %1065 = vmatpush.bf16.msra.mxu0 %v883
        %1066 = vmatpush.bf16.msra.mxu0 %v871
        %1067 = vmatpush.bf16.msra.mxu0 %v859
        %1068 = vmatpush.bf16.msra.mxu0 %v847
        %1069 = vmatpush.bf16.msra.mxu0 %v835
        %1070 = vmatpush.bf16.msra.mxu0 %v823
        %1071 = vmatmul.bf16.gmra.mxu0 %v406
        %v1072 = vpop.f32.mrf.mxu0
        %v1073 = vadd.f32 %v511, %v1072
        %v1074 = vpop.f32.mrf.mxu0
        %1075 = vdwg.mxu0
        %1076 = vmatpush.bf16.msra.mxu0 %v908
        %1077 = vmatpush.bf16.msra.mxu0 %v896
        %1078 = vmatpush.bf16.msra.mxu0 %v884
        %1079 = vmatpush.bf16.msra.mxu0 %v872
        %1080 = vmatpush.bf16.msra.mxu0 %v860
        %1081 = vmatpush.bf16.msra.mxu0 %v848
        %1082 = vmatpush.bf16.msra.mxu0 %v836
        %1083 = vmatpush.bf16.msra.mxu0 %v824
        %1084 = vmatmul.bf16.gmra.mxu0 %v406
        %v1085 = vpop.f32.mrf.mxu0
        %v1086 = vadd.f32 %v512, %v1085
        %v1087 = vpop.f32.mrf.mxu0
        %1088 = vdwg.mxu0
        %1089 = vmatpush.bf16.msra.mxu0 %v909
        %1090 = vmatpush.bf16.msra.mxu0 %v897
        %1091 = vmatpush.bf16.msra.mxu0 %v885
        %1092 = vmatpush.bf16.msra.mxu0 %v873
        %1093 = vmatpush.bf16.msra.mxu0 %v861
        %1094 = vmatpush.bf16.msra.mxu0 %v849
        %1095 = vmatpush.bf16.msra.mxu0 %v837
        %1096 = vmatpush.bf16.msra.mxu0 %v825
        %1097 = vmatmul.bf16.gmra.mxu0 %v406
        %v1098 = vpop.f32.mrf.mxu0
        %v1099 = vadd.f32 %v513, %v1098
        %v1100 = vpop.f32.mrf.mxu0
        %1101 = vdwg.mxu0
        %1102 = vmatpush.bf16.msra.mxu0 %v910
        %1103 = vmatpush.bf16.msra.mxu0 %v898
        %1104 = vmatpush.bf16.msra.mxu0 %v886
        %1105 = vmatpush.bf16.msra.mxu0 %v874
        %1106 = vmatpush.bf16.msra.mxu0 %v862
        %1107 = vmatpush.bf16.msra.mxu0 %v850
        %1108 = vmatpush.bf16.msra.mxu0 %v838
        %1109 = vmatpush.bf16.msra.mxu0 %v826
        %1110 = vmatmul.bf16.gmra.mxu0 %v406
        %v1111 = vpop.f32.mrf.mxu0
        %v1112 = vadd.f32 %v514, %v1111
        %v1113 = vpop.f32.mrf.mxu0
        %1114 = vdwg.mxu0
        %1115 = vmatpush.bf16.msra.mxu0 %v911
        %1116 = vmatpush.bf16.msra.mxu0 %v899
        %1117 = vmatpush.bf16.msra.mxu0 %v887
        %1118 = vmatpush.bf16.msra.mxu0 %v875
        %1119 = vmatpush.bf16.msra.mxu0 %v863
        %1120 = vmatpush.bf16.msra.mxu0 %v851
        %1121 = vmatpush.bf16.msra.mxu0 %v839
        %1122 = vmatpush.bf16.msra.mxu0 %v827
        %1123 = vmatmul.bf16.gmra.mxu0 %v406
        %v1124 = vpop.f32.mrf.mxu0
        %v1125 = vadd.f32 %v515, %v1124
        %v1126 = vpop.f32.mrf.mxu0
        %1127 = vdwg.mxu0
        %1128 = vmatpush.bf16.msra.mxu0 %v912
        %1129 = vmatpush.bf16.msra.mxu0 %v900
        %1130 = vmatpush.bf16.msra.mxu0 %v888
        %1131 = vmatpush.bf16.msra.mxu0 %v876
        %1132 = vmatpush.bf16.msra.mxu0 %v864
        %1133 = vmatpush.bf16.msra.mxu0 %v852
        %1134 = vmatpush.bf16.msra.mxu0 %v840
        %1135 = vmatpush.bf16.msra.mxu0 %v828
        %1136 = vmatmul.bf16.gmra.mxu0 %v406
        %v1137 = vpop.f32.mrf.mxu0
        %v1138 = vadd.f32 %v516, %v1137
        %v1139 = vpop.f32.mrf.mxu0
        %1140 = vdwg.mxu0
        %1141 = vmatpush.bf16.msra.mxu0 %v913
        %1142 = vmatpush.bf16.msra.mxu0 %v901
        %1143 = vmatpush.bf16.msra.mxu0 %v889
        %1144 = vmatpush.bf16.msra.mxu0 %v877
        %1145 = vmatpush.bf16.msra.mxu0 %v865
        %1146 = vmatpush.bf16.msra.mxu0 %v853
        %1147 = vmatpush.bf16.msra.mxu0 %v841
        %1148 = vmatpush.bf16.msra.mxu0 %v829
        %1149 = vmatmul.bf16.gmra.mxu0 %v406
        %v1150 = vpop.f32.mrf.mxu0
        %v1151 = vadd.f32 %v517, %v1150
        %v1152 = vpop.f32.mrf.mxu0
        %1153 = vdwg.mxu0
        %1154 = vmatpush.bf16.msra.mxu0 %v914
        %1155 = vmatpush.bf16.msra.mxu0 %v902
        %1156 = vmatpush.bf16.msra.mxu0 %v890
        %1157 = vmatpush.bf16.msra.mxu0 %v878
        %1158 = vmatpush.bf16.msra.mxu0 %v866
        %1159 = vmatpush.bf16.msra.mxu0 %v854
        %1160 = vmatpush.bf16.msra.mxu0 %v842
        %1161 = vmatpush.bf16.msra.mxu0 %v830
        %1162 = vmatmul.bf16.gmra.mxu0 %v406
        %v1163 = vpop.f32.mrf.mxu0
        %v1164 = vadd.f32 %v518, %v1163
        %v1165 = vpop.f32.mrf.mxu0
        %1166 = vdwg.mxu0
        %v1167 = vpack.c.bf16 %v1034, %v1021
        %v1168 = vpack.c.bf16 %v1060, %v1047
        %v1169 = vpack.c.bf16 %v1086, %v1073
        %v1170 = vpack.c.bf16 %v1112, %v1099
        %v1171 = vpack.c.bf16 %v1138, %v1125
        %v1172 = vpack.c.bf16 %v1164, %v1151
        %v1173 = vld [vmem:[%s352] sm:$0x1]
        %v1174 = vld [vmem:[%s5] sm:$0x1]
        %v1176 = vperm.slane %v1174, 0
        %v1179 = vperm.slane %v1173, 0
        %v1182 = vunpack.c.h.b16 %v1167
        %v1183 = vpack.c.b16 %v1182, %v1182
        %1185 = vmatpush.bf16.xpose.msra.mxu0 0
        %1186 = vmatpush.bf16.xpose.msra.mxu0 0
        %1187 = vmatpush.bf16.xpose.msra.mxu0 0
        %1188 = vmatpush.bf16.xpose.msra.mxu0 0
        %1189 = vmatpush.bf16.xpose.msra.mxu0 0
        %1190 = vmatpush.bf16.xpose.msra.mxu0 0
        %1191 = vmatpush.bf16.xpose.msra.mxu0 0
        %1192 = vmatpush.bf16.xpose.msra.mxu0 %v1183
        %1193 = vmatmul.bf16.gmra.mxu0 %v1167
        %v1194 = vpop.f32.mrf.mxu0
        %v1195 = vadd.f32 %v1179, %v1194
        %v1196 = vpop.f32.mrf.mxu0
        %1197 = vdwg.mxu0
        %vm1198 = vcmask 64512
        %v1199 = vsel %vm1198, %v1195, -inf
        %1200 = vmax.xlane.f32.xlu0 %v1199
        %v1201 = vpop.xlane.xlu0 %1200
        %v1202 = vsub.f32 %v1195, %v1201
        %v1203 = vmul.f32 %v1202, 1.442695
        %v1204 = vpow.pop %v1203
        %v1205 = vsel %vm1198, %v1204, 0.0
        %1206 = vadd.xlane.f32.xlu0 %v1205
        %v1207 = vpop.xlane.xlu0 %1206
        %v1208 = vrcp.pop %v1207
        %v1209 = vmul.f32 %v1204, %v1208
        %v1210 = vpack.c.bf16 %v1209, %v1209
        %v1212 = vsel %vm1198, %v1210, 0
        %vm1214 = vcmask 1043456
        %v1216 = vsel %vm1214, %v1168, 0
        %1218 = vmatpush.bf16.msra.mxu0 0
        %1219 = vmatpush.bf16.msra.mxu0 0
        %1220 = vmatpush.bf16.msra.mxu0 0
        %1221 = vmatpush.bf16.msra.mxu0 0
        %1222 = vmatpush.bf16.msra.mxu0 0
        %1223 = vmatpush.bf16.msra.mxu0 0
        %1224 = vmatpush.bf16.msra.mxu0 0
        %1225 = vmatpush.bf16.msra.mxu0 %v1216
        %1226 = vmatmul.bf16.gmra.mxu0 %v1212
        %v1227 = vpop.f32.mrf.mxu0
        %v1228 = vadd.f32 0.0, %v1227
        %v1229 = vpop.f32.mrf.mxu0
        %1230 = vdwg.mxu0
        %v1231 = vpack.c.bf16 %v1228, %v1228
        %v1232 = vld [vmem:[#allocation10] sm:$0xf]
        %v1233 = vld [vmem:[#allocation10 + $0x4] sm:$0xf]
        %v1234 = vld [vmem:[#allocation10 + $0x8] sm:$0xf]
        %v1235 = vld [vmem:[#allocation10 + $0xc] sm:$0xf]
        %v1236 = vld [vmem:[#allocation10 + $0x10] sm:$0xf]
        %v1237 = vld [vmem:[#allocation10 + $0x14] sm:$0xf]
        %v1238 = vld [vmem:[#allocation10 + $0x18] sm:$0xf]
        %v1239 = vld [vmem:[#allocation10 + $0x1c] sm:$0xf]
        %v1240 = vld [vmem:[#allocation10 + $0x20] sm:$0xf]
        %v1241 = vld [vmem:[#allocation10 + $0x24] sm:$0xf]
        %v1242 = vld [vmem:[#allocation10 + $0x28] sm:$0xf]
        %v1243 = vld [vmem:[#allocation10 + $0x2c] sm:$0xf]
        %v1244 = vld [vmem:[#allocation10 + $0x30] sm:$0xf]
        %v1245 = vld [vmem:[#allocation10 + $0x34] sm:$0xf]
        %v1246 = vld [vmem:[#allocation10 + $0x38] sm:$0xf]
        %v1247 = vld [vmem:[#allocation10 + $0x3c] sm:$0xf]
        %v1264 = vunpack.c.l.b16 %v1232
        %v1265 = vunpack.c.l.b16 %v1233
        %v1266 = vunpack.c.l.b16 %v1234
        %v1267 = vunpack.c.l.b16 %v1235
        %v1268 = vunpack.c.l.b16 %v1236
        %v1269 = vunpack.c.l.b16 %v1237
        %v1270 = vunpack.c.l.b16 %v1238
        %v1271 = vunpack.c.l.b16 %v1239
        %v1272 = vunpack.c.l.b16 %v1240
        %v1273 = vunpack.c.l.b16 %v1241
        %v1274 = vunpack.c.l.b16 %v1242
        %v1275 = vunpack.c.l.b16 %v1243
        %v1276 = vunpack.c.l.b16 %v1244
        %v1277 = vunpack.c.l.b16 %v1245
        %v1278 = vunpack.c.l.b16 %v1246
        %v1279 = vunpack.c.l.b16 %v1247
        %v1280 = vpack.c.b16 %v1265, %v1264
        %v1281 = vpack.c.b16 %v1267, %v1266
        %v1282 = vpack.c.b16 %v1269, %v1268
        %v1283 = vpack.c.b16 %v1271, %v1270
        %v1284 = vpack.c.b16 %v1273, %v1272
        %v1285 = vpack.c.b16 %v1275, %v1274
        %v1286 = vpack.c.b16 %v1277, %v1276
        %v1287 = vpack.c.b16 %v1279, %v1278
        %1296 = vmatpush.bf16.msra.mxu0 %v1287
        %1297 = vmatpush.bf16.msra.mxu0 %v1286
        %1298 = vmatpush.bf16.msra.mxu0 %v1285
        %1299 = vmatpush.bf16.msra.mxu0 %v1284
        %1300 = vmatpush.bf16.msra.mxu0 %v1283
        %1301 = vmatpush.bf16.msra.mxu0 %v1282
        %1302 = vmatpush.bf16.msra.mxu0 %v1281
        %1303 = vmatpush.bf16.msra.mxu0 %v1280
        %1304 = vmatmul.bf16.gmra.mxu0 %v1231
        %v1305 = vpop.f32.mrf.mxu0
        %v1306 = vadd.f32 0.0, %v1305
        %v1307 = vpop.f32.mrf.mxu0
        %1308 = vdwg.mxu0
        %v1309 = vadd.f32 %v1176, %v1306
        %v1311 = vunpack.c.h.b16 %v1168
        %v1312 = vpack.c.b16 %v1311, %v1311
        %1314 = vmatpush.bf16.xpose.msra.mxu0 0
        %1315 = vmatpush.bf16.xpose.msra.mxu0 0
        %1316 = vmatpush.bf16.xpose.msra.mxu0 0
        %1317 = vmatpush.bf16.xpose.msra.mxu0 0
        %1318 = vmatpush.bf16.xpose.msra.mxu0 0
        %1319 = vmatpush.bf16.xpose.msra.mxu0 0
        %1320 = vmatpush.bf16.xpose.msra.mxu0 0
        %1321 = vmatpush.bf16.xpose.msra.mxu0 %v1169
        %1322 = vmatmul.bf16.gmra.mxu0 %v1312
        %v1323 = vpop.f32.mrf.mxu0
        %v1324 = vadd.f32 %v1179, %v1323
        %v1325 = vpop.f32.mrf.mxu0
        %1326 = vdwg.mxu0
        %v1327 = vsel %vm1198, %v1324, -inf
        %1328 = vmax.xlane.f32.xlu0 %v1327
        %v1329 = vpop.xlane.xlu0 %1328
        %v1330 = vsub.f32 %v1324, %v1329
        %v1331 = vmul.f32 %v1330, 1.442695
        %v1332 = vpow.pop %v1331
        %v1333 = vsel %vm1198, %v1332, 0.0
        %1334 = vadd.xlane.f32.xlu0 %v1333
        %v1335 = vpop.xlane.xlu0 %1334
        %v1336 = vrcp.pop %v1335
        %v1337 = vmul.f32 %v1332, %v1336
        %v1338 = vpack.c.bf16 %v1337, %v1337
        %v1340 = vunpack.c.h.b16 %v1169
        %v1341 = vpack.c.b16 %v1340, %v1340
        %v1343 = vsel %vm1198, %v1338, 0
        %v1346 = vsel %vm1214, %v1341, 0
        %1348 = vmatpush.bf16.msra.mxu0 0
        %1349 = vmatpush.bf16.msra.mxu0 0
        %1350 = vmatpush.bf16.msra.mxu0 0
        %1351 = vmatpush.bf16.msra.mxu0 0
        %1352 = vmatpush.bf16.msra.mxu0 0
        %1353 = vmatpush.bf16.msra.mxu0 0
        %1354 = vmatpush.bf16.msra.mxu0 0
        %1355 = vmatpush.bf16.msra.mxu0 %v1346
        %1356 = vmatmul.bf16.gmra.mxu0 %v1343
        %v1357 = vpop.f32.mrf.mxu0
        %v1358 = vadd.f32 0.0, %v1357
        %v1359 = vpop.f32.mrf.mxu0
        %1360 = vdwg.mxu0
        %v1361 = vpack.c.bf16 %v1358, %v1358
        %s1362 = scalar_lea.vmem [#allocation10], 64
        %v1363 = vld [vmem:[%s1362] sm:$0xf]
        %v1364 = vld [vmem:[%s1362 + $0x4] sm:$0xf]
        %v1365 = vld [vmem:[%s1362 + $0x8] sm:$0xf]
        %v1366 = vld [vmem:[%s1362 + $0xc] sm:$0xf]
        %v1367 = vld [vmem:[%s1362 + $0x10] sm:$0xf]
        %v1368 = vld [vmem:[%s1362 + $0x14] sm:$0xf]
        %v1369 = vld [vmem:[%s1362 + $0x18] sm:$0xf]
        %v1370 = vld [vmem:[%s1362 + $0x1c] sm:$0xf]
        %v1371 = vld [vmem:[%s1362 + $0x20] sm:$0xf]
        %v1372 = vld [vmem:[%s1362 + $0x24] sm:$0xf]
        %v1373 = vld [vmem:[%s1362 + $0x28] sm:$0xf]
        %v1374 = vld [vmem:[%s1362 + $0x2c] sm:$0xf]
        %v1375 = vld [vmem:[%s1362 + $0x30] sm:$0xf]
        %v1376 = vld [vmem:[%s1362 + $0x34] sm:$0xf]
        %v1377 = vld [vmem:[%s1362 + $0x38] sm:$0xf]
        %v1378 = vld [vmem:[%s1362 + $0x3c] sm:$0xf]
        %v1395 = vunpack.c.l.b16 %v1363
        %v1396 = vunpack.c.l.b16 %v1364
        %v1397 = vunpack.c.l.b16 %v1365
        %v1398 = vunpack.c.l.b16 %v1366
        %v1399 = vunpack.c.l.b16 %v1367
        %v1400 = vunpack.c.l.b16 %v1368
        %v1401 = vunpack.c.l.b16 %v1369
        %v1402 = vunpack.c.l.b16 %v1370
        %v1403 = vunpack.c.l.b16 %v1371
        %v1404 = vunpack.c.l.b16 %v1372
        %v1405 = vunpack.c.l.b16 %v1373
        %v1406 = vunpack.c.l.b16 %v1374
        %v1407 = vunpack.c.l.b16 %v1375
        %v1408 = vunpack.c.l.b16 %v1376
        %v1409 = vunpack.c.l.b16 %v1377
        %v1410 = vunpack.c.l.b16 %v1378
        %v1411 = vpack.c.b16 %v1396, %v1395
        %v1412 = vpack.c.b16 %v1398, %v1397
        %v1413 = vpack.c.b16 %v1400, %v1399
        %v1414 = vpack.c.b16 %v1402, %v1401
        %v1415 = vpack.c.b16 %v1404, %v1403
        %v1416 = vpack.c.b16 %v1406, %v1405
        %v1417 = vpack.c.b16 %v1408, %v1407
        %v1418 = vpack.c.b16 %v1410, %v1409
        %1427 = vmatpush.bf16.msra.mxu0 %v1418
        %1428 = vmatpush.bf16.msra.mxu0 %v1417
        %1429 = vmatpush.bf16.msra.mxu0 %v1416
        %1430 = vmatpush.bf16.msra.mxu0 %v1415
        %1431 = vmatpush.bf16.msra.mxu0 %v1414
        %1432 = vmatpush.bf16.msra.mxu0 %v1413
        %1433 = vmatpush.bf16.msra.mxu0 %v1412
        %1434 = vmatpush.bf16.msra.mxu0 %v1411
        %1435 = vmatmul.bf16.gmra.mxu0 %v1361
        %v1436 = vpop.f32.mrf.mxu0
        %v1437 = vadd.f32 0.0, %v1436
        %v1438 = vpop.f32.mrf.mxu0
        %1439 = vdwg.mxu0
        %v1440 = vadd.f32 %v1309, %v1437
        %v1442 = vunpack.c.h.b16 %v1170
        %v1443 = vpack.c.b16 %v1442, %v1442
        %1445 = vmatpush.bf16.xpose.msra.mxu0 0
        %1446 = vmatpush.bf16.xpose.msra.mxu0 0
        %1447 = vmatpush.bf16.xpose.msra.mxu0 0
        %1448 = vmatpush.bf16.xpose.msra.mxu0 0
        %1449 = vmatpush.bf16.xpose.msra.mxu0 0
        %1450 = vmatpush.bf16.xpose.msra.mxu0 0
        %1451 = vmatpush.bf16.xpose.msra.mxu0 0
        %1452 = vmatpush.bf16.xpose.msra.mxu0 %v1443
        %1453 = vmatmul.bf16.gmra.mxu0 %v1170
        %v1454 = vpop.f32.mrf.mxu0
        %v1455 = vadd.f32 %v1179, %v1454
        %v1456 = vpop.f32.mrf.mxu0
        %1457 = vdwg.mxu0
        %v1458 = vsel %vm1198, %v1455, -inf
        %1459 = vmax.xlane.f32.xlu0 %v1458
        %v1460 = vpop.xlane.xlu0 %1459
        %v1461 = vsub.f32 %v1455, %v1460
        %v1462 = vmul.f32 %v1461, 1.442695
        %v1463 = vpow.pop %v1462
        %v1464 = vsel %vm1198, %v1463, 0.0
        %1465 = vadd.xlane.f32.xlu0 %v1464
        %v1466 = vpop.xlane.xlu0 %1465
        %v1467 = vrcp.pop %v1466
        %v1468 = vmul.f32 %v1463, %v1467
        %v1469 = vpack.c.bf16 %v1468, %v1468
        %v1471 = vsel %vm1198, %v1469, 0
        %v1474 = vsel %vm1214, %v1171, 0
        %1476 = vmatpush.bf16.msra.mxu0 0
        %1477 = vmatpush.bf16.msra.mxu0 0
        %1478 = vmatpush.bf16.msra.mxu0 0
        %1479 = vmatpush.bf16.msra.mxu0 0
        %1480 = vmatpush.bf16.msra.mxu0 0
        %1481 = vmatpush.bf16.msra.mxu0 0
        %1482 = vmatpush.bf16.msra.mxu0 0
        %1483 = vmatpush.bf16.msra.mxu0 %v1474
        %1484 = vmatmul.bf16.gmra.mxu0 %v1471
        %v1485 = vpop.f32.mrf.mxu0
        %v1486 = vadd.f32 0.0, %v1485
        %v1487 = vpop.f32.mrf.mxu0
        %1488 = vdwg.mxu0
        %v1489 = vpack.c.bf16 %v1486, %v1486
        %s1490 = scalar_lea.vmem [#allocation10], 128
        %v1491 = vld [vmem:[%s1490] sm:$0xf]
        %v1492 = vld [vmem:[%s1490 + $0x4] sm:$0xf]
        %v1493 = vld [vmem:[%s1490 + $0x8] sm:$0xf]
        %v1494 = vld [vmem:[%s1490 + $0xc] sm:$0xf]
        %v1495 = vld [vmem:[%s1490 + $0x10] sm:$0xf]
        %v1496 = vld [vmem:[%s1490 + $0x14] sm:$0xf]
        %v1497 = vld [vmem:[%s1490 + $0x18] sm:$0xf]
        %v1498 = vld [vmem:[%s1490 + $0x1c] sm:$0xf]
        %v1499 = vld [vmem:[%s1490 + $0x20] sm:$0xf]
        %v1500 = vld [vmem:[%s1490 + $0x24] sm:$0xf]
        %v1501 = vld [vmem:[%s1490 + $0x28] sm:$0xf]
        %v1502 = vld [vmem:[%s1490 + $0x2c] sm:$0xf]
        %v1503 = vld [vmem:[%s1490 + $0x30] sm:$0xf]
        %v1504 = vld [vmem:[%s1490 + $0x34] sm:$0xf]
        %v1505 = vld [vmem:[%s1490 + $0x38] sm:$0xf]
        %v1506 = vld [vmem:[%s1490 + $0x3c] sm:$0xf]
        %v1523 = vunpack.c.l.b16 %v1491
        %v1524 = vunpack.c.l.b16 %v1492
        %v1525 = vunpack.c.l.b16 %v1493
        %v1526 = vunpack.c.l.b16 %v1494
        %v1527 = vunpack.c.l.b16 %v1495
        %v1528 = vunpack.c.l.b16 %v1496
        %v1529 = vunpack.c.l.b16 %v1497
        %v1530 = vunpack.c.l.b16 %v1498
        %v1531 = vunpack.c.l.b16 %v1499
        %v1532 = vunpack.c.l.b16 %v1500
        %v1533 = vunpack.c.l.b16 %v1501
        %v1534 = vunpack.c.l.b16 %v1502
        %v1535 = vunpack.c.l.b16 %v1503
        %v1536 = vunpack.c.l.b16 %v1504
        %v1537 = vunpack.c.l.b16 %v1505
        %v1538 = vunpack.c.l.b16 %v1506
        %v1539 = vpack.c.b16 %v1524, %v1523
        %v1540 = vpack.c.b16 %v1526, %v1525
        %v1541 = vpack.c.b16 %v1528, %v1527
        %v1542 = vpack.c.b16 %v1530, %v1529
        %v1543 = vpack.c.b16 %v1532, %v1531
        %v1544 = vpack.c.b16 %v1534, %v1533
        %v1545 = vpack.c.b16 %v1536, %v1535
        %v1546 = vpack.c.b16 %v1538, %v1537
        %1555 = vmatpush.bf16.msra.mxu0 %v1546
        %1556 = vmatpush.bf16.msra.mxu0 %v1545
        %1557 = vmatpush.bf16.msra.mxu0 %v1544
        %1558 = vmatpush.bf16.msra.mxu0 %v1543
        %1559 = vmatpush.bf16.msra.mxu0 %v1542
        %1560 = vmatpush.bf16.msra.mxu0 %v1541
        %1561 = vmatpush.bf16.msra.mxu0 %v1540
        %1562 = vmatpush.bf16.msra.mxu0 %v1539
        %1563 = vmatmul.bf16.gmra.mxu0 %v1489
        %v1564 = vpop.f32.mrf.mxu0
        %v1565 = vadd.f32 0.0, %v1564
        %v1566 = vpop.f32.mrf.mxu0
        %1567 = vdwg.mxu0
        %v1568 = vadd.f32 %v1440, %v1565
        %v1570 = vunpack.c.h.b16 %v1171
        %v1571 = vpack.c.b16 %v1570, %v1570
        %1573 = vmatpush.bf16.xpose.msra.mxu0 0
        %1574 = vmatpush.bf16.xpose.msra.mxu0 0
        %1575 = vmatpush.bf16.xpose.msra.mxu0 0
        %1576 = vmatpush.bf16.xpose.msra.mxu0 0
        %1577 = vmatpush.bf16.xpose.msra.mxu0 0
        %1578 = vmatpush.bf16.xpose.msra.mxu0 0
        %1579 = vmatpush.bf16.xpose.msra.mxu0 0
        %1580 = vmatpush.bf16.xpose.msra.mxu0 %v1172
        %1581 = vmatmul.bf16.gmra.mxu0 %v1571
        %v1582 = vpop.f32.mrf.mxu0
        %v1583 = vadd.f32 %v1179, %v1582
        %v1584 = vpop.f32.mrf.mxu0
        %1585 = vdwg.mxu0
        %v1586 = vsel %vm1198, %v1583, -inf
        %1587 = vmax.xlane.f32.xlu0 %v1586
        %v1588 = vpop.xlane.xlu0 %1587
        %v1589 = vsub.f32 %v1583, %v1588
        %v1590 = vmul.f32 %v1589, 1.442695
        %v1591 = vpow.pop %v1590
        %v1592 = vsel %vm1198, %v1591, 0.0
        %1593 = vadd.xlane.f32.xlu0 %v1592
        %v1594 = vpop.xlane.xlu0 %1593
        %v1595 = vrcp.pop %v1594
        %v1596 = vmul.f32 %v1591, %v1595
        %v1597 = vpack.c.bf16 %v1596, %v1596
        %v1599 = vunpack.c.h.b16 %v1172
        %v1600 = vpack.c.b16 %v1599, %v1599
        %v1602 = vsel %vm1198, %v1597, 0
        %v1605 = vsel %vm1214, %v1600, 0
        %1607 = vmatpush.bf16.msra.mxu0 0
        %1608 = vmatpush.bf16.msra.mxu0 0
        %1609 = vmatpush.bf16.msra.mxu0 0
        %1610 = vmatpush.bf16.msra.mxu0 0
        %1611 = vmatpush.bf16.msra.mxu0 0
        %1612 = vmatpush.bf16.msra.mxu0 0
        %1613 = vmatpush.bf16.msra.mxu0 0
        %1614 = vmatpush.bf16.msra.mxu0 %v1605
        %1615 = vmatmul.bf16.gmra.mxu0 %v1602
        %v1616 = vpop.f32.mrf.mxu0
        %v1617 = vadd.f32 0.0, %v1616
        %v1618 = vpop.f32.mrf.mxu0
        %1619 = vdwg.mxu0
        %v1620 = vpack.c.bf16 %v1617, %v1617
        %s1621 = scalar_lea.vmem [#allocation10], 192
        %v1622 = vld [vmem:[%s1621] sm:$0xf]
        %v1623 = vld [vmem:[%s1621 + $0x4] sm:$0xf]
        %v1624 = vld [vmem:[%s1621 + $0x8] sm:$0xf]
        %v1625 = vld [vmem:[%s1621 + $0xc] sm:$0xf]
        %v1626 = vld [vmem:[%s1621 + $0x10] sm:$0xf]
        %v1627 = vld [vmem:[%s1621 + $0x14] sm:$0xf]
        %v1628 = vld [vmem:[%s1621 + $0x18] sm:$0xf]
        %v1629 = vld [vmem:[%s1621 + $0x1c] sm:$0xf]
        %v1630 = vld [vmem:[%s1621 + $0x20] sm:$0xf]
        %v1631 = vld [vmem:[%s1621 + $0x24] sm:$0xf]
        %v1632 = vld [vmem:[%s1621 + $0x28] sm:$0xf]
        %v1633 = vld [vmem:[%s1621 + $0x2c] sm:$0xf]
        %v1634 = vld [vmem:[%s1621 + $0x30] sm:$0xf]
        %v1635 = vld [vmem:[%s1621 + $0x34] sm:$0xf]
        %v1636 = vld [vmem:[%s1621 + $0x38] sm:$0xf]
        %v1637 = vld [vmem:[%s1621 + $0x3c] sm:$0xf]
        %v1654 = vunpack.c.l.b16 %v1622
        %v1655 = vunpack.c.l.b16 %v1623
        %v1656 = vunpack.c.l.b16 %v1624
        %v1657 = vunpack.c.l.b16 %v1625
        %v1658 = vunpack.c.l.b16 %v1626
        %v1659 = vunpack.c.l.b16 %v1627
        %v1660 = vunpack.c.l.b16 %v1628
        %v1661 = vunpack.c.l.b16 %v1629
        %v1662 = vunpack.c.l.b16 %v1630
        %v1663 = vunpack.c.l.b16 %v1631
        %v1664 = vunpack.c.l.b16 %v1632
        %v1665 = vunpack.c.l.b16 %v1633
        %v1666 = vunpack.c.l.b16 %v1634
        %v1667 = vunpack.c.l.b16 %v1635
        %v1668 = vunpack.c.l.b16 %v1636
        %v1669 = vunpack.c.l.b16 %v1637
        %v1670 = vpack.c.b16 %v1655, %v1654
        %v1671 = vpack.c.b16 %v1657, %v1656
        %v1672 = vpack.c.b16 %v1659, %v1658
        %v1673 = vpack.c.b16 %v1661, %v1660
        %v1674 = vpack.c.b16 %v1663, %v1662
        %v1675 = vpack.c.b16 %v1665, %v1664
        %v1676 = vpack.c.b16 %v1667, %v1666
        %v1677 = vpack.c.b16 %v1669, %v1668
        %1686 = vmatpush.bf16.msra.mxu0 %v1677
        %1687 = vmatpush.bf16.msra.mxu0 %v1676
        %1688 = vmatpush.bf16.msra.mxu0 %v1675
        %1689 = vmatpush.bf16.msra.mxu0 %v1674
        %1690 = vmatpush.bf16.msra.mxu0 %v1673
        %1691 = vmatpush.bf16.msra.mxu0 %v1672
        %1692 = vmatpush.bf16.msra.mxu0 %v1671
        %1693 = vmatpush.bf16.msra.mxu0 %v1670
        %1694 = vmatmul.bf16.gmra.mxu0 %v1620
        %v1695 = vpop.f32.mrf.mxu0
        %v1696 = vadd.f32 0.0, %v1695
        %v1697 = vpop.f32.mrf.mxu0
        %1698 = vdwg.mxu0
        %v1699 = vadd.f32 %v1568, %v1696
        %v1700 = vunpack.c.l.bf16 %v406
        %v1701 = vadd.f32 %v1699, %v1700
        %1702 = vadd.xlane.f32.xlu0 %v1701
        %v1703 = vpop.xlane.xlu0 %1702
        %v1704 = vrcp.pop 32.0
        %v1705 = vmul.f32 32.0, %v1704
        %v1706 = vsub.f32 1.0, %v1705
        %v1707 = vmul.f32 %v1704, %v1706
        %v1708 = vadd.f32 %v1704, %v1707
        %vm1709 = vweird.f32 %v1704
        %v1710 = vsel %vm1709, %v1704, %v1708
        %v1711 = vmul.f32 %v1703, %v1710
        %v1712 = vlaneseq
        %v1713 = vand.u32 %v1712, 127
        %vm1714 = vcmp.lt.s32.totalorder %v1713, 32
        %v1715 = vsub.f32 %v1701, %v1711
        %v1716 = vsel %vm1714, %v1715, 0.0
        %v1717 = vmul.f32 %v1716, %v1716
        %1718 = vadd.xlane.f32.xlu0 %v1717
        %v1719 = vpop.xlane.xlu0 %1718
        %v1720 = vmul.f32 %v1719, %v1710
        %v1721 = vadd.f32 %v1720, 1e-12
        %v1722 = vrsqrt.pop %v1721
        %v1723 = vmul.f32 %v1722, %v1721
        %v1724 = vmul.f32 %v1723, %v1722
        %v1725 = vmul.f32 0.5, %v1724
        %v1726 = vsub.f32 1.5, %v1725
        %v1727 = vmul.f32 %v1722, %v1726
        %vm1728 = vweird.f32 %v1721
        %vm1729 = vweird.f32 %v1722
        %vm1730 = vmor %vm1728, %vm1729
        %v1731 = vsel %vm1730, %v1722, %v1727
        %v1732 = vmul.f32 %v1716, %v1731
        %v1733 = vld [vmem:[%s6] sm:$0x1]
        %v1735 = vperm.slane %v1733, 0
        %v1737 = vmul.f32 %v1732, %v1735
        %v1738 = vld [vmem:[%s7] sm:$0x1]
        %v1740 = vperm.slane %v1738, 0
        %v1742 = vadd.f32 %v1737, %v1740
        %1743 = vst [vmem:[%s404] sm:$0xff] %v1742
        %s1744 = sand.u32 %s215, 1
        %s1745 = scalar_lea.sflag [#allocation4], %s1744
        %s1746 = sand.u32 %s215, 1
        %s1747 = smul.addr %s1746, 8
        %s1748 = scalar_lea.vmem [#allocation11], %s1747
        // Predicated region
        $region73: #{tpu_custom_call.1} parent=51 // pred_check
          %p1749 = pneg %p225
        $region74: #{tpu_custom_call.1} parent=51 // pred_check_branch
          %1751 = sbr.rel (%p1749) target = $region76
        $region75: #{tpu_custom_call.1} parent=51 // pred_region
          %1753 = vsyncadd %s1745, 0
          %s1754 = smul.addr %s29, 8
          %s1755 = scalar_lea.hbm %s8, %s1754
          %s1757 = sshll.u32 %s1748, 4
          %s1758 = int_to_ptr.vmem [resolvable:$true] %s1757
          %s1759 = sshll.u32 %s1755, 4
          %s1760 = int_to_ptr.hbm [resolvable:$true] %s1759
          %1762 = dma.vmem_to_hbm [thread:$0]  %s1758, 128, %s1760, %s1745
        $region76: #{tpu_custom_call.1} parent=51 // pred_fallthru
          _
      $region52: #{tpu_custom_call.1} parent=5 // pred_fallthru
        _
      %p1763 = scmp.le.s32.totalorder 2, %s24
      // Predicated region
      $region77: #{tpu_custom_call.1} parent=5 // pred_check
        %p1764 = pneg %p1763
      $region78: #{tpu_custom_call.1} parent=5 // pred_check_branch
        %1766 = sbr.rel (%p1764) target = $region80
      $region79: #{tpu_custom_call.1} parent=5 // pred_region
        %s1767 = ssub.s32 %s24, 2
        // Predicated region
        $region81: #{tpu_custom_call.1} parent=79 // pred_check
          %p1768 = pneg %p231
        $region82: #{tpu_custom_call.1} parent=79 // pred_check_branch
          %1770 = sbr.rel (%p1768) target = $region84
        $region83: #{tpu_custom_call.1} parent=79 // pred_region
          %s1771 = sand.u32 %s216, 1
          %s1772 = scalar_lea.sflag [#allocation4], %s1771
          %s1773 = sand.u32 %s216, 1
          %s1774 = smul.addr %s1773, 8
          %s1775 = scalar_lea.vmem [#allocation11], %s1774
          %1777 = dma.done %s1772, 128
        $region84: #{tpu_custom_call.1} parent=79 // pred_fallthru
          _
      $region80: #{tpu_custom_call.1} parent=5 // pred_fallthru
        _
    $region6: #{tpu_custom_call.1} parent=1 // loop_footer
      %s28 = sadd.s32 1, %s24
    $region7: #{tpu_custom_call.1} parent=1 // loop_footer_branch
      %23 = sbr.rel target = $region3
    $region8: #{tpu_custom_call.1} parent=1 // loop_exit
      _
    %1778 = vsyncpa [#allocation3], 1
    %s1779 = scalar_lea.sflag [#allocation3], 1
    %1780 = vsyncpa %s1779, 1
    %1781 = vsyncpa [#allocation6], 1
    %s1782 = scalar_lea.sflag [#allocation6], 1
    %1783 = vsyncpa %s1782, 1
    %1784 = vsyncpa [#allocation9], 1
    %1785 = vsyncpa [#allocation4], 1
    %s1786 = scalar_lea.sflag [#allocation4], 1
    %1787 = vsyncpa %s1786, 1

</llo_original>
